<compile_context>
chip_gen: v7x
topology: tpu7x:2x2x1
jax: 0.10.0
libtpu: 0.0.40
codegen_flags: <defaults>
</compile_context>

<pallas_src>
import jax
import jax.numpy as jnp
from jax import lax
from jax.experimental import pallas as pl
from jax.experimental.pallas import tpu as pltpu

# ---------------- model config (small, consistent with the module) ----------
T = 8            # sequence length
B = 2            # batch size of the module
BP = 8           # padded batch: fills all 8 f32 sublanes at zero extra cost
I = 16           # input_dim
H = 32           # hidden_dim
O = 8            # output_dim
G = 4 * H        # gate width (128 -> exactly one f32 vreg lane span)


def lstm_kernel(x_ref, wih0_ref, wh0f_ref, whh1_ref, b0_ref, b1_ref,
                wfc_ref, bfc_ref, out_ref, xproj_s, last_s):
    """All refs are whole-array VMEM views.

    x_ref   : (T*BP, I)   input, batch pre-padded to BP and pre-flattened
    wih0_ref: (I, 4H)     W_ih0^T
    wh0f_ref: (H, 8H)     [W_hh0^T | W_ih1^T]  (fused 256-wide RHS for h0_t)
    whh1_ref: (H, 4H)     W_hh1^T
    b0_ref  : (1, 4H)     b_ih0 + b_hh0
    b1_ref  : (1, 4H)     b_ih1 + b_hh1
    wfc_ref : (H, O)      fc weight^T
    bfc_ref : (1, O)
    out_ref : (T*BP, O)   fc output for every (step, padded-batch) row
    xproj_s : (T*BP, 4H)  scratch: precomputed layer-0 input projection
    last_s  : (T*BP, H)   scratch: layer-1 hidden per step (full-tile stores)
    """
    # ---- one-shot layer-0 input projection for every timestep (off the
    #      serial critical path): single (T*BP, I) x (I, 4H) MXU matmul.
    #      No in-kernel reshape: x arrives dense (T*BP, I).
    xproj_s[...] = (jnp.dot(x_ref[...], wih0_ref[...],
                            preferred_element_type=jnp.float32)
                    + b0_ref[...])

    # ---- hoist loop-invariant weight loads / bias broadcast out of the loop.
    wh0f = wh0f_ref[...]                                     # (H, 8H)
    whh1 = whh1_ref[...]                                     # (H, 4H)
    b1 = jnp.broadcast_to(b1_ref[...], (BP, G))              # (BP, 4H), once

    def gate_split(gates):
        # Two full-width EUP pushes instead of four sliced ones.
        sig = jax.nn.sigmoid(gates)
        th = jnp.tanh(gates)
        i = sig[:, 0 * H:1 * H]
        f = sig[:, 1 * H:2 * H]
        g = th[:, 2 * H:3 * H]
        o = sig[:, 3 * H:4 * H]
        return i, f, g, o

    def body(t, carry):
        # h0rec = h0_{t-1} @ Whh0^T, carried so layer-0 needs NO matmul on its
        # own critical path at step t.
        h0rec, c0, h1, c1 = carry
        # Layer-1 recurrent partial depends only on step t-1 state: issue it
        # first so the MXU push + b1 add overlap all of layer-0's EUP/VPU work.
        whh1_part = jnp.dot(h1, whh1,
                            preferred_element_type=jnp.float32) + b1
        base = pl.multiple_of(t * BP, BP)                     # 8-sublane aligned
        # ---- layer 0 cell (input projection precomputed, recurrent part carried)
        gates0 = xproj_s[pl.ds(base, BP), :] + h0rec
        i0, f0, g0, o0 = gate_split(gates0)
        c0 = f0 * c0 + i0 * g0
        h0 = o0 * jnp.tanh(c0)
        # ---- single 256-wide MXU push on the h0_t chain: columns [0,4H) are
        #      h0_t @ Whh0^T (needed at step t+1), columns [4H,8H) are
        #      h0_t @ Wih1^T (needed now).  Lane-128-aligned slices -> free.
        both = jnp.dot(h0, wh0f, preferred_element_type=jnp.float32)  # (BP, 8H)
        h0rec_next = both[:, :G]
        gates1 = both[:, G:] + whh1_part
        i1, f1, g1, o1 = gate_split(gates1)
        c1 = f1 * c1 + i1 * g1
        h1 = o1 * jnp.tanh(c1)
        # Full 8-sublane store (no sublane extract, no (1,H) masked store);
        # not on the carried dependency chain, hides under next step's matmuls.
        last_s[pl.ds(base, BP), :] = h1
        return (h0rec_next, c0, h1, c1)

    z_state = jnp.zeros((BP, H), jnp.float32)
    z_rec = jnp.zeros((BP, G), jnp.float32)
    # Fully unrolled: exposes cross-step ILP to the scheduler.
    lax.fori_loop(0, T, body, (z_rec, z_state, z_state, z_state), unroll=True)

    # fc on every (step, padded-batch) row: one tiny MXU matmul, done once,
    # off the critical path.  The wrapper selects batch row B-1 per step.
    out_ref[...] = (jnp.dot(last_s[...], wfc_ref[...],
                            preferred_element_type=jnp.float32)
                    + bfc_ref[...])


def lstm_forward_pallas(x, params):
    # Zero-pad batch to BP (fills f32 sublanes; padded rows are discarded) and
    # flatten (T, BP, I) -> (T*BP, I) OUTSIDE the kernel so no tile-crossing
    # relayout happens inside it.
    x_pad = jnp.zeros((T, BP, I), jnp.float32).at[:, :B, :].set(x)
    x_flat = x_pad.reshape(T * BP, I)

    wih0_t = params["w_ih0"].T                                        # (I, 4H)
    whh0_t = params["w_hh0"].T                                        # (H, 4H)
    wih1_t = params["w_ih1"].T                                        # (H, 4H)
    whh1_t = params["w_hh1"].T                                        # (H, 4H)
    kernel_args = (
        x_flat,
        wih0_t,
        jnp.concatenate([whh0_t, wih1_t], axis=1),                    # (H, 8H)
        whh1_t,
        (params["b_ih0"] + params["b_hh0"]).reshape(1, G),            # (1, 4H)
        (params["b_ih1"] + params["b_hh1"]).reshape(1, G),            # (1, 4H)
        params["w_fc"].T,                                             # (H, O)
        params["b_fc"].reshape(1, O),                                 # (1, O)
    )

    # Advisory cost estimate so XLA schedules this micro-kernel cheaply.
    flops = (2 * T * BP * I * G             # layer-0 input projection
             + 2 * T * BP * H * G           # layer-1 recurrent partials
             + 2 * T * BP * H * 2 * G       # fused [Whh0|Wih1] pushes
             + 2 * T * BP * H * O)          # fc
    transcendentals = T * 2 * (2 * BP * G + BP * H)
    bytes_accessed = int(sum(int(a.size) * 4 for a in kernel_args)
                         + T * BP * O * 4)

    vmem = pl.BlockSpec(memory_space=pltpu.MemorySpace.VMEM)
    out_full = pl.pallas_call(
        lstm_kernel,
        out_shape=jax.ShapeDtypeStruct((T * BP, O), jnp.float32),
        in_specs=[vmem] * len(kernel_args),
        out_specs=vmem,
        scratch_shapes=[
            pltpu.VMEM((T * BP, G), jnp.float32),   # dense layer-0 projection
            pltpu.VMEM((T * BP, H), jnp.float32),   # layer-1 hidden per step
        ],
        cost_estimate=pl.CostEstimate(flops=flops,
                                      transcendentals=transcendentals,
                                      bytes_accessed=bytes_accessed),
    )(*kernel_args)

    # out[:, -1, :] on a (T, B, H) tensor == batch index B-1 per timestep.
    return out_full.reshape(T, BP, O)[:, B - 1, :]


# ---------------- pure-JAX reference for verification -----------------------
def lstm_forward_ref(x, params):
    def run_layer(xs, wih, whh, bih, bhh):
        def step(carry, x_t):
            h, c = carry
            g = x_t @ wih.T + h @ whh.T + bih + bhh
            i = jax.nn.sigmoid(g[:, 0 * H:1 * H])
            f = jax.nn.sigmoid(g[:, 1 * H:2 * H])
            gg = jnp.tanh(g[:, 2 * H:3 * H])
            o = jax.nn.sigmoid(g[:, 3 * H:4 * H])
            c = f * c + i * gg
            h = o * jnp.tanh(c)
            return (h, c), h
        init = (jnp.zeros((B, H), jnp.float32), jnp.zeros((B, H), jnp.float32))
        _, hs = jax.lax.scan(step, init, xs)
        return hs                                          # (T, B, H)

    h = run_layer(x, params["w_ih0"], params["w_hh0"],
                  params["b_ih0"], params["b_hh0"])
    h = run_layer(h, params["w_ih1"], params["w_hh1"],
                  params["b_ih1"], params["b_hh1"])
    last = h[:, -1, :]                                     # (T, H)
    return last @ params["w_fc"].T + params["b_fc"]        # (T, O)


def make_params(key):
    scale = 1.0 / jnp.sqrt(jnp.float32(H))
    ks = jax.random.split(key, 10)
    u = lambda k, shape: jax.random.uniform(k, shape, jnp.float32, -scale, scale)
    return {
        "w_ih0": u(ks[0], (4 * H, I)),
        "w_hh0": u(ks[1], (4 * H, H)),
        "b_ih0": u(ks[2], (4 * H,)),
        "b_hh0": u(ks[3], (4 * H,)),
        "w_ih1": u(ks[4], (4 * H, H)),
        "w_hh1": u(ks[5], (4 * H, H)),
        "b_ih1": u(ks[6], (4 * H,)),
        "b_hh1": u(ks[7], (4 * H,)),
        "w_fc":  u(ks[8], (O, H)),
        "b_fc":  u(ks[9], (O,)),
    }


if __name__ == "__main__":
    key = jax.random.PRNGKey(0)
    kx, kp = jax.random.split(key)
    x = jax.random.normal(kx, (T, B, I), jnp.float32)
    params = make_params(kp)

    out = lstm_forward_pallas(x, params)
    out = jax.block_until_ready(out)

    ref = lstm_forward_ref(x, params)
    assert out.shape == (T, O), out.shape
    assert jnp.allclose(out, ref, atol=1e-4, rtol=1e-4), (
        float(jnp.max(jnp.abs(out - ref))))

    print("KERNEL_OK")
</pallas_src>

<mosaic_0001>
module attributes {stable_mosaic.version = 11 : i64} {
  func.func @lstm_kernel(%arg0: memref<64x16xf32, #tpu.memory_space<vmem>>, %arg1: memref<16x128xf32, #tpu.memory_space<vmem>>, %arg2: memref<32x256xf32, #tpu.memory_space<vmem>>, %arg3: memref<32x128xf32, #tpu.memory_space<vmem>>, %arg4: memref<1x128xf32, #tpu.memory_space<vmem>>, %arg5: memref<1x128xf32, #tpu.memory_space<vmem>>, %arg6: memref<32x8xf32, #tpu.memory_space<vmem>>, %arg7: memref<1x8xf32, #tpu.memory_space<vmem>>, %arg8: memref<64x8xf32, #tpu.memory_space<vmem>>, %arg9: memref<64x128xf32, #tpu.memory_space<vmem>>, %arg10: memref<64x32xf32, #tpu.memory_space<vmem>>) attributes {dimension_semantics = [], scalar_prefetch = 0 : i64, scratch_operands = 2 : i64, tpu.core_type = #tpu.core_type<tc>} {
    %c0 = arith.constant 0 : index
    %c0_0 = arith.constant 0 : index
    %0 = vector.load %arg0[%c0, %c0_0] : memref<64x16xf32, #tpu.memory_space<vmem>>, vector<64x16xf32>
    %c0_1 = arith.constant 0 : index
    %c0_2 = arith.constant 0 : index
    %1 = vector.load %arg1[%c0_1, %c0_2] : memref<16x128xf32, #tpu.memory_space<vmem>>, vector<16x128xf32>
    %cst = arith.constant dense<0.000000e+00> : vector<64x128xf32>
    %2 = tpu.matmul %0, %1, %cst {dimension_numbers = #tpu.dot_dimension_numbers<[1], [0], [0], [1], [0, 0, 1, 1], [], []>} : vector<64x16xf32>, vector<16x128xf32>, vector<64x128xf32> -> vector<64x128xf32>
    %c0_3 = arith.constant 0 : index
    %c0_4 = arith.constant 0 : index
    %3 = vector.load %arg4[%c0_3, %c0_4] : memref<1x128xf32, #tpu.memory_space<vmem>>, vector<1x128xf32>
    %4 = vector.broadcast %3 : vector<1x128xf32> to vector<64x128xf32>
    %5 = arith.addf %2, %4 : vector<64x128xf32>
    %c0_5 = arith.constant 0 : index
    %c0_6 = arith.constant 0 : index
    %6 = vector.load %arg9[%c0_5, %c0_6] : memref<64x128xf32, #tpu.memory_space<vmem>>, vector<64x128xf32>
    tpu.vector_store %arg9[%c0_5, %c0_6], %5 {strides = array<i32>} : memref<64x128xf32, #tpu.memory_space<vmem>>, vector<64x128xf32>,
    %c0_7 = arith.constant 0 : index
    %c0_8 = arith.constant 0 : index
    %7 = vector.load %arg2[%c0_7, %c0_8] : memref<32x256xf32, #tpu.memory_space<vmem>>, vector<32x256xf32>
    %c0_9 = arith.constant 0 : index
    %c0_10 = arith.constant 0 : index
    %8 = vector.load %arg3[%c0_9, %c0_10] : memref<32x128xf32, #tpu.memory_space<vmem>>, vector<32x128xf32>
    %c0_11 = arith.constant 0 : index
    %c0_12 = arith.constant 0 : index
    %9 = vector.load %arg5[%c0_11, %c0_12] : memref<1x128xf32, #tpu.memory_space<vmem>>, vector<1x128xf32>
    %10 = vector.shape_cast %9 : vector<1x128xf32> to vector<1x128xf32>
    %11 = vector.broadcast %10 : vector<1x128xf32> to vector<8x128xf32>
    %cst_13 = arith.constant 0.000000e+00 : f32
    %12 = vector.broadcast %cst_13 : f32 to vector<8x32xf32>
    %cst_14 = arith.constant 0.000000e+00 : f32
    %13 = vector.broadcast %cst_14 : f32 to vector<8x128xf32>
    %c0_i32 = arith.constant 0 : i32
    %cst_15 = arith.constant dense<0.000000e+00> : vector<8x128xf32>
    %14 = tpu.matmul %12, %8, %cst_15 {dimension_numbers = #tpu.dot_dimension_numbers<[1], [0], [0], [1], [0, 0, 1, 1], [], []>} : vector<8x32xf32>, vector<32x128xf32>, vector<8x128xf32> -> vector<8x128xf32>
    %15 = arith.addf %14, %11 : vector<8x128xf32>
    %c8_i32 = arith.constant 8 : i32
    %16 = arith.muli %c0_i32, %c8_i32 : i32
    %17 = tpu.assume_multiple %16, 8 : i32
    %18 = arith.index_cast %17 : i32 to index
    %c0_16 = arith.constant 0 : index
    %19 = vector.load %arg9[%18, %c0_16] : memref<64x128xf32, #tpu.memory_space<vmem>>, vector<8x128xf32>
    %20 = arith.addf %19, %13 : vector<8x128xf32>
    %21 = arith.negf %20 : vector<8x128xf32>
    %22 = math.exp %21 : vector<8x128xf32>
    %cst_17 = arith.constant 1.000000e+00 : f32
    %23 = vector.broadcast %cst_17 : f32 to vector<8x128xf32>
    %24 = arith.addf %23, %22 : vector<8x128xf32>
    %25 = arith.divf %23, %24 : vector<8x128xf32>
    %26 = math.tanh %20 : vector<8x128xf32>
    %27 = vector.extract_strided_slice %25 {offsets = [0, 0], sizes = [8, 32], strides = [1, 1]} : vector<8x128xf32> to vector<8x32xf32>
    %28 = vector.extract_strided_slice %25 {offsets = [0, 32], sizes = [8, 32], strides = [1, 1]} : vector<8x128xf32> to vector<8x32xf32>
    %29 = vector.extract_strided_slice %26 {offsets = [0, 64], sizes = [8, 32], strides = [1, 1]} : vector<8x128xf32> to vector<8x32xf32>
    %30 = vector.extract_strided_slice %25 {offsets = [0, 96], sizes = [8, 32], strides = [1, 1]} : vector<8x128xf32> to vector<8x32xf32>
    %31 = arith.mulf %28, %12 : vector<8x32xf32>
    %32 = arith.mulf %27, %29 : vector<8x32xf32>
    %33 = arith.addf %31, %32 : vector<8x32xf32>
    %34 = math.tanh %33 : vector<8x32xf32>
    %35 = arith.mulf %30, %34 : vector<8x32xf32>
    %cst_18 = arith.constant dense<0.000000e+00> : vector<8x256xf32>
    %36 = tpu.matmul %35, %7, %cst_18 {dimension_numbers = #tpu.dot_dimension_numbers<[1], [0], [0], [1], [0, 0, 1, 1], [], []>} : vector<8x32xf32>, vector<32x256xf32>, vector<8x256xf32> -> vector<8x256xf32>
    %37 = vector.extract_strided_slice %36 {offsets = [0, 0], sizes = [8, 128], strides = [1, 1]} : vector<8x256xf32> to vector<8x128xf32>
    %38 = vector.extract_strided_slice %36 {offsets = [0, 128], sizes = [8, 128], strides = [1, 1]} : vector<8x256xf32> to vector<8x128xf32>
    %39 = arith.addf %38, %15 : vector<8x128xf32>
    %40 = arith.negf %39 : vector<8x128xf32>
    %41 = math.exp %40 : vector<8x128xf32>
    %cst_19 = arith.constant 1.000000e+00 : f32
    %42 = vector.broadcast %cst_19 : f32 to vector<8x128xf32>
    %43 = arith.addf %42, %41 : vector<8x128xf32>
    %44 = arith.divf %42, %43 : vector<8x128xf32>
    %45 = math.tanh %39 : vector<8x128xf32>
    %46 = vector.extract_strided_slice %44 {offsets = [0, 0], sizes = [8, 32], strides = [1, 1]} : vector<8x128xf32> to vector<8x32xf32>
    %47 = vector.extract_strided_slice %44 {offsets = [0, 32], sizes = [8, 32], strides = [1, 1]} : vector<8x128xf32> to vector<8x32xf32>
    %48 = vector.extract_strided_slice %45 {offsets = [0, 64], sizes = [8, 32], strides = [1, 1]} : vector<8x128xf32> to vector<8x32xf32>
    %49 = vector.extract_strided_slice %44 {offsets = [0, 96], sizes = [8, 32], strides = [1, 1]} : vector<8x128xf32> to vector<8x32xf32>
    %50 = arith.mulf %47, %12 : vector<8x32xf32>
    %51 = arith.mulf %46, %48 : vector<8x32xf32>
    %52 = arith.addf %50, %51 : vector<8x32xf32>
    %53 = math.tanh %52 : vector<8x32xf32>
    %54 = arith.mulf %49, %53 : vector<8x32xf32>
    %55 = arith.index_cast %17 : i32 to index
    %c0_20 = arith.constant 0 : index
    %56 = vector.load %arg10[%55, %c0_20] : memref<64x32xf32, #tpu.memory_space<vmem>>, vector<8x32xf32>
    tpu.vector_store %arg10[%55, %c0_20], %54 {strides = array<i32>} : memref<64x32xf32, #tpu.memory_space<vmem>>, vector<8x32xf32>,
    %c1_i32 = arith.constant 1 : i32
    %cst_21 = arith.constant dense<0.000000e+00> : vector<8x128xf32>
    %57 = tpu.matmul %54, %8, %cst_21 {dimension_numbers = #tpu.dot_dimension_numbers<[1], [0], [0], [1], [0, 0, 1, 1], [], []>} : vector<8x32xf32>, vector<32x128xf32>, vector<8x128xf32> -> vector<8x128xf32>
    %58 = arith.addf %57, %11 : vector<8x128xf32>
    %c8_i32_22 = arith.constant 8 : i32
    %59 = arith.muli %c1_i32, %c8_i32_22 : i32
    %60 = tpu.assume_multiple %59, 8 : i32
    %61 = arith.index_cast %60 : i32 to index
    %c0_23 = arith.constant 0 : index
    %62 = vector.load %arg9[%61, %c0_23] : memref<64x128xf32, #tpu.memory_space<vmem>>, vector<8x128xf32>
    %63 = arith.addf %62, %37 : vector<8x128xf32>
    %64 = arith.negf %63 : vector<8x128xf32>
    %65 = math.exp %64 : vector<8x128xf32>
    %cst_24 = arith.constant 1.000000e+00 : f32
    %66 = vector.broadcast %cst_24 : f32 to vector<8x128xf32>
    %67 = arith.addf %66, %65 : vector<8x128xf32>
    %68 = arith.divf %66, %67 : vector<8x128xf32>
    %69 = math.tanh %63 : vector<8x128xf32>
    %70 = vector.extract_strided_slice %68 {offsets = [0, 0], sizes = [8, 32], strides = [1, 1]} : vector<8x128xf32> to vector<8x32xf32>
    %71 = vector.extract_strided_slice %68 {offsets = [0, 32], sizes = [8, 32], strides = [1, 1]} : vector<8x128xf32> to vector<8x32xf32>
    %72 = vector.extract_strided_slice %69 {offsets = [0, 64], sizes = [8, 32], strides = [1, 1]} : vector<8x128xf32> to vector<8x32xf32>
    %73 = vector.extract_strided_slice %68 {offsets = [0, 96], sizes = [8, 32], strides = [1, 1]} : vector<8x128xf32> to vector<8x32xf32>
    %74 = arith.mulf %71, %33 : vector<8x32xf32>
    %75 = arith.mulf %70, %72 : vector<8x32xf32>
    %76 = arith.addf %74, %75 : vector<8x32xf32>
    %77 = math.tanh %76 : vector<8x32xf32>
    %78 = arith.mulf %73, %77 : vector<8x32xf32>
    %cst_25 = arith.constant dense<0.000000e+00> : vector<8x256xf32>
    %79 = tpu.matmul %78, %7, %cst_25 {dimension_numbers = #tpu.dot_dimension_numbers<[1], [0], [0], [1], [0, 0, 1, 1], [], []>} : vector<8x32xf32>, vector<32x256xf32>, vector<8x256xf32> -> vector<8x256xf32>
    %80 = vector.extract_strided_slice %79 {offsets = [0, 0], sizes = [8, 128], strides = [1, 1]} : vector<8x256xf32> to vector<8x128xf32>
    %81 = vector.extract_strided_slice %79 {offsets = [0, 128], sizes = [8, 128], strides = [1, 1]} : vector<8x256xf32> to vector<8x128xf32>
    %82 = arith.addf %81, %58 : vector<8x128xf32>
    %83 = arith.negf %82 : vector<8x128xf32>
    %84 = math.exp %83 : vector<8x128xf32>
    %cst_26 = arith.constant 1.000000e+00 : f32
    %85 = vector.broadcast %cst_26 : f32 to vector<8x128xf32>
    %86 = arith.addf %85, %84 : vector<8x128xf32>
    %87 = arith.divf %85, %86 : vector<8x128xf32>
    %88 = math.tanh %82 : vector<8x128xf32>
    %89 = vector.extract_strided_slice %87 {offsets = [0, 0], sizes = [8, 32], strides = [1, 1]} : vector<8x128xf32> to vector<8x32xf32>
    %90 = vector.extract_strided_slice %87 {offsets = [0, 32], sizes = [8, 32], strides = [1, 1]} : vector<8x128xf32> to vector<8x32xf32>
    %91 = vector.extract_strided_slice %88 {offsets = [0, 64], sizes = [8, 32], strides = [1, 1]} : vector<8x128xf32> to vector<8x32xf32>
    %92 = vector.extract_strided_slice %87 {offsets = [0, 96], sizes = [8, 32], strides = [1, 1]} : vector<8x128xf32> to vector<8x32xf32>
    %93 = arith.mulf %90, %52 : vector<8x32xf32>
    %94 = arith.mulf %89, %91 : vector<8x32xf32>
    %95 = arith.addf %93, %94 : vector<8x32xf32>
    %96 = math.tanh %95 : vector<8x32xf32>
    %97 = arith.mulf %92, %96 : vector<8x32xf32>
    %98 = arith.index_cast %60 : i32 to index
    %c0_27 = arith.constant 0 : index
    %99 = vector.load %arg10[%98, %c0_27] : memref<64x32xf32, #tpu.memory_space<vmem>>, vector<8x32xf32>
    tpu.vector_store %arg10[%98, %c0_27], %97 {strides = array<i32>} : memref<64x32xf32, #tpu.memory_space<vmem>>, vector<8x32xf32>,
    %c2_i32 = arith.constant 2 : i32
    %cst_28 = arith.constant dense<0.000000e+00> : vector<8x128xf32>
    %100 = tpu.matmul %97, %8, %cst_28 {dimension_numbers = #tpu.dot_dimension_numbers<[1], [0], [0], [1], [0, 0, 1, 1], [], []>} : vector<8x32xf32>, vector<32x128xf32>, vector<8x128xf32> -> vector<8x128xf32>
    %101 = arith.addf %100, %11 : vector<8x128xf32>
    %c8_i32_29 = arith.constant 8 : i32
    %102 = arith.muli %c2_i32, %c8_i32_29 : i32
    %103 = tpu.assume_multiple %102, 8 : i32
    %104 = arith.index_cast %103 : i32 to index
    %c0_30 = arith.constant 0 : index
    %105 = vector.load %arg9[%104, %c0_30] : memref<64x128xf32, #tpu.memory_space<vmem>>, vector<8x128xf32>
    %106 = arith.addf %105, %80 : vector<8x128xf32>
    %107 = arith.negf %106 : vector<8x128xf32>
    %108 = math.exp %107 : vector<8x128xf32>
    %cst_31 = arith.constant 1.000000e+00 : f32
    %109 = vector.broadcast %cst_31 : f32 to vector<8x128xf32>
    %110 = arith.addf %109, %108 : vector<8x128xf32>
    %111 = arith.divf %109, %110 : vector<8x128xf32>
    %112 = math.tanh %106 : vector<8x128xf32>
    %113 = vector.extract_strided_slice %111 {offsets = [0, 0], sizes = [8, 32], strides = [1, 1]} : vector<8x128xf32> to vector<8x32xf32>
    %114 = vector.extract_strided_slice %111 {offsets = [0, 32], sizes = [8, 32], strides = [1, 1]} : vector<8x128xf32> to vector<8x32xf32>
    %115 = vector.extract_strided_slice %112 {offsets = [0, 64], sizes = [8, 32], strides = [1, 1]} : vector<8x128xf32> to vector<8x32xf32>
    %116 = vector.extract_strided_slice %111 {offsets = [0, 96], sizes = [8, 32], strides = [1, 1]} : vector<8x128xf32> to vector<8x32xf32>
    %117 = arith.mulf %114, %76 : vector<8x32xf32>
    %118 = arith.mulf %113, %115 : vector<8x32xf32>
    %119 = arith.addf %117, %118 : vector<8x32xf32>
    %120 = math.tanh %119 : vector<8x32xf32>
    %121 = arith.mulf %116, %120 : vector<8x32xf32>
    %cst_32 = arith.constant dense<0.000000e+00> : vector<8x256xf32>
    %122 = tpu.matmul %121, %7, %cst_32 {dimension_numbers = #tpu.dot_dimension_numbers<[1], [0], [0], [1], [0, 0, 1, 1], [], []>} : vector<8x32xf32>, vector<32x256xf32>, vector<8x256xf32> -> vector<8x256xf32>
    %123 = vector.extract_strided_slice %122 {offsets = [0, 0], sizes = [8, 128], strides = [1, 1]} : vector<8x256xf32> to vector<8x128xf32>
    %124 = vector.extract_strided_slice %122 {offsets = [0, 128], sizes = [8, 128], strides = [1, 1]} : vector<8x256xf32> to vector<8x128xf32>
    %125 = arith.addf %124, %101 : vector<8x128xf32>
    %126 = arith.negf %125 : vector<8x128xf32>
    %127 = math.exp %126 : vector<8x128xf32>
    %cst_33 = arith.constant 1.000000e+00 : f32
    %128 = vector.broadcast %cst_33 : f32 to vector<8x128xf32>
    %129 = arith.addf %128, %127 : vector<8x128xf32>
    %130 = arith.divf %128, %129 : vector<8x128xf32>
    %131 = math.tanh %125 : vector<8x128xf32>
    %132 = vector.extract_strided_slice %130 {offsets = [0, 0], sizes = [8, 32], strides = [1, 1]} : vector<8x128xf32> to vector<8x32xf32>
    %133 = vector.extract_strided_slice %130 {offsets = [0, 32], sizes = [8, 32], strides = [1, 1]} : vector<8x128xf32> to vector<8x32xf32>
    %134 = vector.extract_strided_slice %131 {offsets = [0, 64], sizes = [8, 32], strides = [1, 1]} : vector<8x128xf32> to vector<8x32xf32>
    %135 = vector.extract_strided_slice %130 {offsets = [0, 96], sizes = [8, 32], strides = [1, 1]} : vector<8x128xf32> to vector<8x32xf32>
    %136 = arith.mulf %133, %95 : vector<8x32xf32>
    %137 = arith.mulf %132, %134 : vector<8x32xf32>
    %138 = arith.addf %136, %137 : vector<8x32xf32>
    %139 = math.tanh %138 : vector<8x32xf32>
    %140 = arith.mulf %135, %139 : vector<8x32xf32>
    %141 = arith.index_cast %103 : i32 to index
    %c0_34 = arith.constant 0 : index
    %142 = vector.load %arg10[%141, %c0_34] : memref<64x32xf32, #tpu.memory_space<vmem>>, vector<8x32xf32>
    tpu.vector_store %arg10[%141, %c0_34], %140 {strides = array<i32>} : memref<64x32xf32, #tpu.memory_space<vmem>>, vector<8x32xf32>,
    %c3_i32 = arith.constant 3 : i32
    %cst_35 = arith.constant dense<0.000000e+00> : vector<8x128xf32>
    %143 = tpu.matmul %140, %8, %cst_35 {dimension_numbers = #tpu.dot_dimension_numbers<[1], [0], [0], [1], [0, 0, 1, 1], [], []>} : vector<8x32xf32>, vector<32x128xf32>, vector<8x128xf32> -> vector<8x128xf32>
    %144 = arith.addf %143, %11 : vector<8x128xf32>
    %c8_i32_36 = arith.constant 8 : i32
    %145 = arith.muli %c3_i32, %c8_i32_36 : i32
    %146 = tpu.assume_multiple %145, 8 : i32
    %147 = arith.index_cast %146 : i32 to index
    %c0_37 = arith.constant 0 : index
    %148 = vector.load %arg9[%147, %c0_37] : memref<64x128xf32, #tpu.memory_space<vmem>>, vector<8x128xf32>
    %149 = arith.addf %148, %123 : vector<8x128xf32>
    %150 = arith.negf %149 : vector<8x128xf32>
    %151 = math.exp %150 : vector<8x128xf32>
    %cst_38 = arith.constant 1.000000e+00 : f32
    %152 = vector.broadcast %cst_38 : f32 to vector<8x128xf32>
    %153 = arith.addf %152, %151 : vector<8x128xf32>
    %154 = arith.divf %152, %153 : vector<8x128xf32>
    %155 = math.tanh %149 : vector<8x128xf32>
    %156 = vector.extract_strided_slice %154 {offsets = [0, 0], sizes = [8, 32], strides = [1, 1]} : vector<8x128xf32> to vector<8x32xf32>
    %157 = vector.extract_strided_slice %154 {offsets = [0, 32], sizes = [8, 32], strides = [1, 1]} : vector<8x128xf32> to vector<8x32xf32>
    %158 = vector.extract_strided_slice %155 {offsets = [0, 64], sizes = [8, 32], strides = [1, 1]} : vector<8x128xf32> to vector<8x32xf32>
    %159 = vector.extract_strided_slice %154 {offsets = [0, 96], sizes = [8, 32], strides = [1, 1]} : vector<8x128xf32> to vector<8x32xf32>
    %160 = arith.mulf %157, %119 : vector<8x32xf32>
    %161 = arith.mulf %156, %158 : vector<8x32xf32>
    %162 = arith.addf %160, %161 : vector<8x32xf32>
    %163 = math.tanh %162 : vector<8x32xf32>
    %164 = arith.mulf %159, %163 : vector<8x32xf32>
    %cst_39 = arith.constant dense<0.000000e+00> : vector<8x256xf32>
    %165 = tpu.matmul %164, %7, %cst_39 {dimension_numbers = #tpu.dot_dimension_numbers<[1], [0], [0], [1], [0, 0, 1, 1], [], []>} : vector<8x32xf32>, vector<32x256xf32>, vector<8x256xf32> -> vector<8x256xf32>
    %166 = vector.extract_strided_slice %165 {offsets = [0, 0], sizes = [8, 128], strides = [1, 1]} : vector<8x256xf32> to vector<8x128xf32>
    %167 = vector.extract_strided_slice %165 {offsets = [0, 128], sizes = [8, 128], strides = [1, 1]} : vector<8x256xf32> to vector<8x128xf32>
    %168 = arith.addf %167, %144 : vector<8x128xf32>
    %169 = arith.negf %168 : vector<8x128xf32>
    %170 = math.exp %169 : vector<8x128xf32>
    %cst_40 = arith.constant 1.000000e+00 : f32
    %171 = vector.broadcast %cst_40 : f32 to vector<8x128xf32>
    %172 = arith.addf %171, %170 : vector<8x128xf32>
    %173 = arith.divf %171, %172 : vector<8x128xf32>
    %174 = math.tanh %168 : vector<8x128xf32>
    %175 = vector.extract_strided_slice %173 {offsets = [0, 0], sizes = [8, 32], strides = [1, 1]} : vector<8x128xf32> to vector<8x32xf32>
    %176 = vector.extract_strided_slice %173 {offsets = [0, 32], sizes = [8, 32], strides = [1, 1]} : vector<8x128xf32> to vector<8x32xf32>
    %177 = vector.extract_strided_slice %174 {offsets = [0, 64], sizes = [8, 32], strides = [1, 1]} : vector<8x128xf32> to vector<8x32xf32>
    %178 = vector.extract_strided_slice %173 {offsets = [0, 96], sizes = [8, 32], strides = [1, 1]} : vector<8x128xf32> to vector<8x32xf32>
    %179 = arith.mulf %176, %138 : vector<8x32xf32>
    %180 = arith.mulf %175, %177 : vector<8x32xf32>
    %181 = arith.addf %179, %180 : vector<8x32xf32>
    %182 = math.tanh %181 : vector<8x32xf32>
    %183 = arith.mulf %178, %182 : vector<8x32xf32>
    %184 = arith.index_cast %146 : i32 to index
    %c0_41 = arith.constant 0 : index
    %185 = vector.load %arg10[%184, %c0_41] : memref<64x32xf32, #tpu.memory_space<vmem>>, vector<8x32xf32>
    tpu.vector_store %arg10[%184, %c0_41], %183 {strides = array<i32>} : memref<64x32xf32, #tpu.memory_space<vmem>>, vector<8x32xf32>,
    %c4_i32 = arith.constant 4 : i32
    %cst_42 = arith.constant dense<0.000000e+00> : vector<8x128xf32>
    %186 = tpu.matmul %183, %8, %cst_42 {dimension_numbers = #tpu.dot_dimension_numbers<[1], [0], [0], [1], [0, 0, 1, 1], [], []>} : vector<8x32xf32>, vector<32x128xf32>, vector<8x128xf32> -> vector<8x128xf32>
    %187 = arith.addf %186, %11 : vector<8x128xf32>
    %c8_i32_43 = arith.constant 8 : i32
    %188 = arith.muli %c4_i32, %c8_i32_43 : i32
    %189 = tpu.assume_multiple %188, 8 : i32
    %190 = arith.index_cast %189 : i32 to index
    %c0_44 = arith.constant 0 : index
    %191 = vector.load %arg9[%190, %c0_44] : memref<64x128xf32, #tpu.memory_space<vmem>>, vector<8x128xf32>
    %192 = arith.addf %191, %166 : vector<8x128xf32>
    %193 = arith.negf %192 : vector<8x128xf32>
    %194 = math.exp %193 : vector<8x128xf32>
    %cst_45 = arith.constant 1.000000e+00 : f32
    %195 = vector.broadcast %cst_45 : f32 to vector<8x128xf32>
    %196 = arith.addf %195, %194 : vector<8x128xf32>
    %197 = arith.divf %195, %196 : vector<8x128xf32>
    %198 = math.tanh %192 : vector<8x128xf32>
    %199 = vector.extract_strided_slice %197 {offsets = [0, 0], sizes = [8, 32], strides = [1, 1]} : vector<8x128xf32> to vector<8x32xf32>
    %200 = vector.extract_strided_slice %197 {offsets = [0, 32], sizes = [8, 32], strides = [1, 1]} : vector<8x128xf32> to vector<8x32xf32>
    %201 = vector.extract_strided_slice %198 {offsets = [0, 64], sizes = [8, 32], strides = [1, 1]} : vector<8x128xf32> to vector<8x32xf32>
    %202 = vector.extract_strided_slice %197 {offsets = [0, 96], sizes = [8, 32], strides = [1, 1]} : vector<8x128xf32> to vector<8x32xf32>
    %203 = arith.mulf %200, %162 : vector<8x32xf32>
    %204 = arith.mulf %199, %201 : vector<8x32xf32>
    %205 = arith.addf %203, %204 : vector<8x32xf32>
    %206 = math.tanh %205 : vector<8x32xf32>
    %207 = arith.mulf %202, %206 : vector<8x32xf32>
    %cst_46 = arith.constant dense<0.000000e+00> : vector<8x256xf32>
    %208 = tpu.matmul %207, %7, %cst_46 {dimension_numbers = #tpu.dot_dimension_numbers<[1], [0], [0], [1], [0, 0, 1, 1], [], []>} : vector<8x32xf32>, vector<32x256xf32>, vector<8x256xf32> -> vector<8x256xf32>
    %209 = vector.extract_strided_slice %208 {offsets = [0, 0], sizes = [8, 128], strides = [1, 1]} : vector<8x256xf32> to vector<8x128xf32>
    %210 = vector.extract_strided_slice %208 {offsets = [0, 128], sizes = [8, 128], strides = [1, 1]} : vector<8x256xf32> to vector<8x128xf32>
    %211 = arith.addf %210, %187 : vector<8x128xf32>
    %212 = arith.negf %211 : vector<8x128xf32>
    %213 = math.exp %212 : vector<8x128xf32>
    %cst_47 = arith.constant 1.000000e+00 : f32
    %214 = vector.broadcast %cst_47 : f32 to vector<8x128xf32>
    %215 = arith.addf %214, %213 : vector<8x128xf32>
    %216 = arith.divf %214, %215 : vector<8x128xf32>
    %217 = math.tanh %211 : vector<8x128xf32>
    %218 = vector.extract_strided_slice %216 {offsets = [0, 0], sizes = [8, 32], strides = [1, 1]} : vector<8x128xf32> to vector<8x32xf32>
    %219 = vector.extract_strided_slice %216 {offsets = [0, 32], sizes = [8, 32], strides = [1, 1]} : vector<8x128xf32> to vector<8x32xf32>
    %220 = vector.extract_strided_slice %217 {offsets = [0, 64], sizes = [8, 32], strides = [1, 1]} : vector<8x128xf32> to vector<8x32xf32>
    %221 = vector.extract_strided_slice %216 {offsets = [0, 96], sizes = [8, 32], strides = [1, 1]} : vector<8x128xf32> to vector<8x32xf32>
    %222 = arith.mulf %219, %181 : vector<8x32xf32>
    %223 = arith.mulf %218, %220 : vector<8x32xf32>
    %224 = arith.addf %222, %223 : vector<8x32xf32>
    %225 = math.tanh %224 : vector<8x32xf32>
    %226 = arith.mulf %221, %225 : vector<8x32xf32>
    %227 = arith.index_cast %189 : i32 to index
    %c0_48 = arith.constant 0 : index
    %228 = vector.load %arg10[%227, %c0_48] : memref<64x32xf32, #tpu.memory_space<vmem>>, vector<8x32xf32>
    tpu.vector_store %arg10[%227, %c0_48], %226 {strides = array<i32>} : memref<64x32xf32, #tpu.memory_space<vmem>>, vector<8x32xf32>,
    %c5_i32 = arith.constant 5 : i32
    %cst_49 = arith.constant dense<0.000000e+00> : vector<8x128xf32>
    %229 = tpu.matmul %226, %8, %cst_49 {dimension_numbers = #tpu.dot_dimension_numbers<[1], [0], [0], [1], [0, 0, 1, 1], [], []>} : vector<8x32xf32>, vector<32x128xf32>, vector<8x128xf32> -> vector<8x128xf32>
    %230 = arith.addf %229, %11 : vector<8x128xf32>
    %c8_i32_50 = arith.constant 8 : i32
    %231 = arith.muli %c5_i32, %c8_i32_50 : i32
    %232 = tpu.assume_multiple %231, 8 : i32
    %233 = arith.index_cast %232 : i32 to index
    %c0_51 = arith.constant 0 : index
    %234 = vector.load %arg9[%233, %c0_51] : memref<64x128xf32, #tpu.memory_space<vmem>>, vector<8x128xf32>
    %235 = arith.addf %234, %209 : vector<8x128xf32>
    %236 = arith.negf %235 : vector<8x128xf32>
    %237 = math.exp %236 : vector<8x128xf32>
    %cst_52 = arith.constant 1.000000e+00 : f32
    %238 = vector.broadcast %cst_52 : f32 to vector<8x128xf32>
    %239 = arith.addf %238, %237 : vector<8x128xf32>
    %240 = arith.divf %238, %239 : vector<8x128xf32>
    %241 = math.tanh %235 : vector<8x128xf32>
    %242 = vector.extract_strided_slice %240 {offsets = [0, 0], sizes = [8, 32], strides = [1, 1]} : vector<8x128xf32> to vector<8x32xf32>
    %243 = vector.extract_strided_slice %240 {offsets = [0, 32], sizes = [8, 32], strides = [1, 1]} : vector<8x128xf32> to vector<8x32xf32>
    %244 = vector.extract_strided_slice %241 {offsets = [0, 64], sizes = [8, 32], strides = [1, 1]} : vector<8x128xf32> to vector<8x32xf32>
    %245 = vector.extract_strided_slice %240 {offsets = [0, 96], sizes = [8, 32], strides = [1, 1]} : vector<8x128xf32> to vector<8x32xf32>
    %246 = arith.mulf %243, %205 : vector<8x32xf32>
    %247 = arith.mulf %242, %244 : vector<8x32xf32>
    %248 = arith.addf %246, %247 : vector<8x32xf32>
    %249 = math.tanh %248 : vector<8x32xf32>
    %250 = arith.mulf %245, %249 : vector<8x32xf32>
    %cst_53 = arith.constant dense<0.000000e+00> : vector<8x256xf32>
    %251 = tpu.matmul %250, %7, %cst_53 {dimension_numbers = #tpu.dot_dimension_numbers<[1], [0], [0], [1], [0, 0, 1, 1], [], []>} : vector<8x32xf32>, vector<32x256xf32>, vector<8x256xf32> -> vector<8x256xf32>
    %252 = vector.extract_strided_slice %251 {offsets = [0, 0], sizes = [8, 128], strides = [1, 1]} : vector<8x256xf32> to vector<8x128xf32>
    %253 = vector.extract_strided_slice %251 {offsets = [0, 128], sizes = [8, 128], strides = [1, 1]} : vector<8x256xf32> to vector<8x128xf32>
    %254 = arith.addf %253, %230 : vector<8x128xf32>
    %255 = arith.negf %254 : vector<8x128xf32>
    %256 = math.exp %255 : vector<8x128xf32>
    %cst_54 = arith.constant 1.000000e+00 : f32
    %257 = vector.broadcast %cst_54 : f32 to vector<8x128xf32>
    %258 = arith.addf %257, %256 : vector<8x128xf32>
    %259 = arith.divf %257, %258 : vector<8x128xf32>
    %260 = math.tanh %254 : vector<8x128xf32>
    %261 = vector.extract_strided_slice %259 {offsets = [0, 0], sizes = [8, 32], strides = [1, 1]} : vector<8x128xf32> to vector<8x32xf32>
    %262 = vector.extract_strided_slice %259 {offsets = [0, 32], sizes = [8, 32], strides = [1, 1]} : vector<8x128xf32> to vector<8x32xf32>
    %263 = vector.extract_strided_slice %260 {offsets = [0, 64], sizes = [8, 32], strides = [1, 1]} : vector<8x128xf32> to vector<8x32xf32>
    %264 = vector.extract_strided_slice %259 {offsets = [0, 96], sizes = [8, 32], strides = [1, 1]} : vector<8x128xf32> to vector<8x32xf32>
    %265 = arith.mulf %262, %224 : vector<8x32xf32>
    %266 = arith.mulf %261, %263 : vector<8x32xf32>
    %267 = arith.addf %265, %266 : vector<8x32xf32>
    %268 = math.tanh %267 : vector<8x32xf32>
    %269 = arith.mulf %264, %268 : vector<8x32xf32>
    %270 = arith.index_cast %232 : i32 to index
    %c0_55 = arith.constant 0 : index
    %271 = vector.load %arg10[%270, %c0_55] : memref<64x32xf32, #tpu.memory_space<vmem>>, vector<8x32xf32>
    tpu.vector_store %arg10[%270, %c0_55], %269 {strides = array<i32>} : memref<64x32xf32, #tpu.memory_space<vmem>>, vector<8x32xf32>,
    %c6_i32 = arith.constant 6 : i32
    %cst_56 = arith.constant dense<0.000000e+00> : vector<8x128xf32>
    %272 = tpu.matmul %269, %8, %cst_56 {dimension_numbers = #tpu.dot_dimension_numbers<[1], [0], [0], [1], [0, 0, 1, 1], [], []>} : vector<8x32xf32>, vector<32x128xf32>, vector<8x128xf32> -> vector<8x128xf32>
    %273 = arith.addf %272, %11 : vector<8x128xf32>
    %c8_i32_57 = arith.constant 8 : i32
    %274 = arith.muli %c6_i32, %c8_i32_57 : i32
    %275 = tpu.assume_multiple %274, 8 : i32
    %276 = arith.index_cast %275 : i32 to index
    %c0_58 = arith.constant 0 : index
    %277 = vector.load %arg9[%276, %c0_58] : memref<64x128xf32, #tpu.memory_space<vmem>>, vector<8x128xf32>
    %278 = arith.addf %277, %252 : vector<8x128xf32>
    %279 = arith.negf %278 : vector<8x128xf32>
    %280 = math.exp %279 : vector<8x128xf32>
    %cst_59 = arith.constant 1.000000e+00 : f32
    %281 = vector.broadcast %cst_59 : f32 to vector<8x128xf32>
    %282 = arith.addf %281, %280 : vector<8x128xf32>
    %283 = arith.divf %281, %282 : vector<8x128xf32>
    %284 = math.tanh %278 : vector<8x128xf32>
    %285 = vector.extract_strided_slice %283 {offsets = [0, 0], sizes = [8, 32], strides = [1, 1]} : vector<8x128xf32> to vector<8x32xf32>
    %286 = vector.extract_strided_slice %283 {offsets = [0, 32], sizes = [8, 32], strides = [1, 1]} : vector<8x128xf32> to vector<8x32xf32>
    %287 = vector.extract_strided_slice %284 {offsets = [0, 64], sizes = [8, 32], strides = [1, 1]} : vector<8x128xf32> to vector<8x32xf32>
    %288 = vector.extract_strided_slice %283 {offsets = [0, 96], sizes = [8, 32], strides = [1, 1]} : vector<8x128xf32> to vector<8x32xf32>
    %289 = arith.mulf %286, %248 : vector<8x32xf32>
    %290 = arith.mulf %285, %287 : vector<8x32xf32>
    %291 = arith.addf %289, %290 : vector<8x32xf32>
    %292 = math.tanh %291 : vector<8x32xf32>
    %293 = arith.mulf %288, %292 : vector<8x32xf32>
    %cst_60 = arith.constant dense<0.000000e+00> : vector<8x256xf32>
    %294 = tpu.matmul %293, %7, %cst_60 {dimension_numbers = #tpu.dot_dimension_numbers<[1], [0], [0], [1], [0, 0, 1, 1], [], []>} : vector<8x32xf32>, vector<32x256xf32>, vector<8x256xf32> -> vector<8x256xf32>
    %295 = vector.extract_strided_slice %294 {offsets = [0, 0], sizes = [8, 128], strides = [1, 1]} : vector<8x256xf32> to vector<8x128xf32>
    %296 = vector.extract_strided_slice %294 {offsets = [0, 128], sizes = [8, 128], strides = [1, 1]} : vector<8x256xf32> to vector<8x128xf32>
    %297 = arith.addf %296, %273 : vector<8x128xf32>
    %298 = arith.negf %297 : vector<8x128xf32>
    %299 = math.exp %298 : vector<8x128xf32>
    %cst_61 = arith.constant 1.000000e+00 : f32
    %300 = vector.broadcast %cst_61 : f32 to vector<8x128xf32>
    %301 = arith.addf %300, %299 : vector<8x128xf32>
    %302 = arith.divf %300, %301 : vector<8x128xf32>
    %303 = math.tanh %297 : vector<8x128xf32>
    %304 = vector.extract_strided_slice %302 {offsets = [0, 0], sizes = [8, 32], strides = [1, 1]} : vector<8x128xf32> to vector<8x32xf32>
    %305 = vector.extract_strided_slice %302 {offsets = [0, 32], sizes = [8, 32], strides = [1, 1]} : vector<8x128xf32> to vector<8x32xf32>
    %306 = vector.extract_strided_slice %303 {offsets = [0, 64], sizes = [8, 32], strides = [1, 1]} : vector<8x128xf32> to vector<8x32xf32>
    %307 = vector.extract_strided_slice %302 {offsets = [0, 96], sizes = [8, 32], strides = [1, 1]} : vector<8x128xf32> to vector<8x32xf32>
    %308 = arith.mulf %305, %267 : vector<8x32xf32>
    %309 = arith.mulf %304, %306 : vector<8x32xf32>
    %310 = arith.addf %308, %309 : vector<8x32xf32>
    %311 = math.tanh %310 : vector<8x32xf32>
    %312 = arith.mulf %307, %311 : vector<8x32xf32>
    %313 = arith.index_cast %275 : i32 to index
    %c0_62 = arith.constant 0 : index
    %314 = vector.load %arg10[%313, %c0_62] : memref<64x32xf32, #tpu.memory_space<vmem>>, vector<8x32xf32>
    tpu.vector_store %arg10[%313, %c0_62], %312 {strides = array<i32>} : memref<64x32xf32, #tpu.memory_space<vmem>>, vector<8x32xf32>,
    %c7_i32 = arith.constant 7 : i32
    %cst_63 = arith.constant dense<0.000000e+00> : vector<8x128xf32>
    %315 = tpu.matmul %312, %8, %cst_63 {dimension_numbers = #tpu.dot_dimension_numbers<[1], [0], [0], [1], [0, 0, 1, 1], [], []>} : vector<8x32xf32>, vector<32x128xf32>, vector<8x128xf32> -> vector<8x128xf32>
    %316 = arith.addf %315, %11 : vector<8x128xf32>
    %c8_i32_64 = arith.constant 8 : i32
    %317 = arith.muli %c7_i32, %c8_i32_64 : i32
    %318 = tpu.assume_multiple %317, 8 : i32
    %319 = arith.index_cast %318 : i32 to index
    %c0_65 = arith.constant 0 : index
    %320 = vector.load %arg9[%319, %c0_65] : memref<64x128xf32, #tpu.memory_space<vmem>>, vector<8x128xf32>
    %321 = arith.addf %320, %295 : vector<8x128xf32>
    %322 = arith.negf %321 : vector<8x128xf32>
    %323 = math.exp %322 : vector<8x128xf32>
    %cst_66 = arith.constant 1.000000e+00 : f32
    %324 = vector.broadcast %cst_66 : f32 to vector<8x128xf32>
    %325 = arith.addf %324, %323 : vector<8x128xf32>
    %326 = arith.divf %324, %325 : vector<8x128xf32>
    %327 = math.tanh %321 : vector<8x128xf32>
    %328 = vector.extract_strided_slice %326 {offsets = [0, 0], sizes = [8, 32], strides = [1, 1]} : vector<8x128xf32> to vector<8x32xf32>
    %329 = vector.extract_strided_slice %326 {offsets = [0, 32], sizes = [8, 32], strides = [1, 1]} : vector<8x128xf32> to vector<8x32xf32>
    %330 = vector.extract_strided_slice %327 {offsets = [0, 64], sizes = [8, 32], strides = [1, 1]} : vector<8x128xf32> to vector<8x32xf32>
    %331 = vector.extract_strided_slice %326 {offsets = [0, 96], sizes = [8, 32], strides = [1, 1]} : vector<8x128xf32> to vector<8x32xf32>
    %332 = arith.mulf %329, %291 : vector<8x32xf32>
    %333 = arith.mulf %328, %330 : vector<8x32xf32>
    %334 = arith.addf %332, %333 : vector<8x32xf32>
    %335 = math.tanh %334 : vector<8x32xf32>
    %336 = arith.mulf %331, %335 : vector<8x32xf32>
    %cst_67 = arith.constant dense<0.000000e+00> : vector<8x256xf32>
    %337 = tpu.matmul %336, %7, %cst_67 {dimension_numbers = #tpu.dot_dimension_numbers<[1], [0], [0], [1], [0, 0, 1, 1], [], []>} : vector<8x32xf32>, vector<32x256xf32>, vector<8x256xf32> -> vector<8x256xf32>
    %338 = vector.extract_strided_slice %337 {offsets = [0, 0], sizes = [8, 128], strides = [1, 1]} : vector<8x256xf32> to vector<8x128xf32>
    %339 = vector.extract_strided_slice %337 {offsets = [0, 128], sizes = [8, 128], strides = [1, 1]} : vector<8x256xf32> to vector<8x128xf32>
    %340 = arith.addf %339, %316 : vector<8x128xf32>
    %341 = arith.negf %340 : vector<8x128xf32>
    %342 = math.exp %341 : vector<8x128xf32>
    %cst_68 = arith.constant 1.000000e+00 : f32
    %343 = vector.broadcast %cst_68 : f32 to vector<8x128xf32>
    %344 = arith.addf %343, %342 : vector<8x128xf32>
    %345 = arith.divf %343, %344 : vector<8x128xf32>
    %346 = math.tanh %340 : vector<8x128xf32>
    %347 = vector.extract_strided_slice %345 {offsets = [0, 0], sizes = [8, 32], strides = [1, 1]} : vector<8x128xf32> to vector<8x32xf32>
    %348 = vector.extract_strided_slice %345 {offsets = [0, 32], sizes = [8, 32], strides = [1, 1]} : vector<8x128xf32> to vector<8x32xf32>
    %349 = vector.extract_strided_slice %346 {offsets = [0, 64], sizes = [8, 32], strides = [1, 1]} : vector<8x128xf32> to vector<8x32xf32>
    %350 = vector.extract_strided_slice %345 {offsets = [0, 96], sizes = [8, 32], strides = [1, 1]} : vector<8x128xf32> to vector<8x32xf32>
    %351 = arith.mulf %348, %310 : vector<8x32xf32>
    %352 = arith.mulf %347, %349 : vector<8x32xf32>
    %353 = arith.addf %351, %352 : vector<8x32xf32>
    %354 = math.tanh %353 : vector<8x32xf32>
    %355 = arith.mulf %350, %354 : vector<8x32xf32>
    %356 = arith.index_cast %318 : i32 to index
    %c0_69 = arith.constant 0 : index
    %357 = vector.load %arg10[%356, %c0_69] : memref<64x32xf32, #tpu.memory_space<vmem>>, vector<8x32xf32>
    tpu.vector_store %arg10[%356, %c0_69], %355 {strides = array<i32>} : memref<64x32xf32, #tpu.memory_space<vmem>>, vector<8x32xf32>,
    %c8_i32_70 = arith.constant 8 : i32
    %c0_71 = arith.constant 0 : index
    %c0_72 = arith.constant 0 : index
    %358 = vector.load %arg10[%c0_71, %c0_72] : memref<64x32xf32, #tpu.memory_space<vmem>>, vector<64x32xf32>
    %c0_73 = arith.constant 0 : index
    %c0_74 = arith.constant 0 : index
    %359 = vector.load %arg6[%c0_73, %c0_74] : memref<32x8xf32, #tpu.memory_space<vmem>>, vector<32x8xf32>
    %cst_75 = arith.constant dense<0.000000e+00> : vector<64x8xf32>
    %360 = tpu.matmul %358, %359, %cst_75 {dimension_numbers = #tpu.dot_dimension_numbers<[1], [0], [0], [1], [0, 0, 1, 1], [], []>} : vector<64x32xf32>, vector<32x8xf32>, vector<64x8xf32> -> vector<64x8xf32>
    %c0_76 = arith.constant 0 : index
    %c0_77 = arith.constant 0 : index
    %361 = vector.load %arg7[%c0_76, %c0_77] : memref<1x8xf32, #tpu.memory_space<vmem>>, vector<1x8xf32>
    %362 = vector.broadcast %361 : vector<1x8xf32> to vector<64x8xf32>
    %363 = arith.addf %360, %362 : vector<64x8xf32>
    %c0_78 = arith.constant 0 : index
    %c0_79 = arith.constant 0 : index
    %364 = vector.load %arg8[%c0_78, %c0_79] : memref<64x8xf32, #tpu.memory_space<vmem>>, vector<64x8xf32>
    tpu.vector_store %arg8[%c0_78, %c0_79], %363 {strides = array<i32>} : memref<64x8xf32, #tpu.memory_space<vmem>>, vector<64x8xf32>,
    return
  }
}

</mosaic_0001>

<llo_original>
// kernel: tpu_custom_call.1
$region0: #{tpu_custom_call.1}
  #allocation0 [shape = 'u32[]', space=smem, size = 0x4, offset = 0x4, fixed_abs, tag = 'smem constant byte address 0x4 - core index']
  #allocation1 [shape = 'u32[144,128]{1,0:T(1,128)}', space=vmem, size = 0x12000, scoped, tag = 'internal scratch']
  #allocation2 [shape = 'f32[64,128]{1,0:T(8,128)}', space=vmem, size = 0x8000, scoped, tag = 'scratch operand']
  #allocation3 [shape = 'f32[64,32]{1,0:T(8,128)}', space=vmem, size = 0x8000, scoped, tag = 'scratch operand']
  %s0 = inlined_call_operand.vmem [shape: f32[64,16], index: 0, kind: input, shape index: {}]
  %s1 = inlined_call_operand.vmem [shape: f32[16,128], index: 1, kind: input, shape index: {}]
  %s2 = inlined_call_operand.vmem [shape: f32[32,256], index: 2, kind: input, shape index: {}]
  %s3 = inlined_call_operand.vmem [shape: f32[32,128], index: 3, kind: input, shape index: {}]
  %s4 = inlined_call_operand.vmem [shape: f32[1,128], index: 4, kind: input, shape index: {}]
  %s5 = inlined_call_operand.vmem [shape: f32[1,128], index: 5, kind: input, shape index: {}]
  %s6 = inlined_call_operand.vmem [shape: f32[32,8], index: 6, kind: input, shape index: {}]
  %s7 = inlined_call_operand.vmem [shape: f32[1,8], index: 7, kind: input, shape index: {}]
  %s8 = inlined_call_operand.vmem [shape: f32[64,8], index: 8, kind: output, shape index: {}]
  %s9 = sld [smem:[#allocation0]]
  $region42: #{tpu_custom_call.1} parent=0
    _
  %s11 = ssub.s32 1, %s9
  %s12 = scalar_select 0, %s11, %s9
  // Predicated region
  $region2: #{tpu_custom_call.1} parent=0 // pred_check
    _
  $region3: #{tpu_custom_call.1} parent=0 // pred_check_branch
    %14 = sbr.rel (0) target = $region5
  $region4: #{tpu_custom_call.1} parent=0 // pred_region
    _
  $region5: #{tpu_custom_call.1} parent=0 // pred_fallthru
    _
  // Predicated region
  $region6: #{tpu_custom_call.1} parent=0 // pred_check
    _
  $region7: #{tpu_custom_call.1} parent=0 // pred_check_branch
    %16 = sbr.rel (0) target = $region9
  $region8: #{tpu_custom_call.1} parent=0 // pred_region
    _
  $region9: #{tpu_custom_call.1} parent=0 // pred_fallthru
    _
  // Predicated region
  $region10: #{tpu_custom_call.1} parent=0 // pred_check
    _
  $region11: #{tpu_custom_call.1} parent=0 // pred_check_branch
    %18 = sbr.rel (0) target = $region13
  $region12: #{tpu_custom_call.1} parent=0 // pred_region
    _
  $region13: #{tpu_custom_call.1} parent=0 // pred_fallthru
    _
  // Predicated region
  $region14: #{tpu_custom_call.1} parent=0 // pred_check
    _
  $region15: #{tpu_custom_call.1} parent=0 // pred_check_branch
    %20 = sbr.rel (0) target = $region17
  $region16: #{tpu_custom_call.1} parent=0 // pred_region
    _
  $region17: #{tpu_custom_call.1} parent=0 // pred_fallthru
    _
  // Predicated region
  $region18: #{tpu_custom_call.1} parent=0 // pred_check
    _
  $region19: #{tpu_custom_call.1} parent=0 // pred_check_branch
    %22 = sbr.rel (0) target = $region21
  $region20: #{tpu_custom_call.1} parent=0 // pred_region
    _
  $region21: #{tpu_custom_call.1} parent=0 // pred_fallthru
    _
  // Predicated region
  $region22: #{tpu_custom_call.1} parent=0 // pred_check
    _
  $region23: #{tpu_custom_call.1} parent=0 // pred_check_branch
    %24 = sbr.rel (0) target = $region25
  $region24: #{tpu_custom_call.1} parent=0 // pred_region
    _
  $region25: #{tpu_custom_call.1} parent=0 // pred_fallthru
    _
  // Predicated region
  $region26: #{tpu_custom_call.1} parent=0 // pred_check
    _
  $region27: #{tpu_custom_call.1} parent=0 // pred_check_branch
    %26 = sbr.rel (0) target = $region29
  $region28: #{tpu_custom_call.1} parent=0 // pred_region
    _
  $region29: #{tpu_custom_call.1} parent=0 // pred_fallthru
    _
  // Predicated region
  $region30: #{tpu_custom_call.1} parent=0 // pred_check
    _
  $region31: #{tpu_custom_call.1} parent=0 // pred_check_branch
    %28 = sbr.rel (0) target = $region33
  $region32: #{tpu_custom_call.1} parent=0 // pred_region
    _
  $region33: #{tpu_custom_call.1} parent=0 // pred_fallthru
    _
  %v29 = vld [vmem:[%s0] sm:$0xff]
  %v30 = vld [vmem:[%s0 + $0x8] sm:$0xff]
  %v31 = vld [vmem:[%s0 + $0x10] sm:$0xff]
  %v32 = vld [vmem:[%s0 + $0x18] sm:$0xff]
  %v33 = vld [vmem:[%s0 + $0x20] sm:$0xff]
  %v34 = vld [vmem:[%s0 + $0x28] sm:$0xff]
  %v35 = vld [vmem:[%s0 + $0x30] sm:$0xff]
  %v36 = vld [vmem:[%s0 + $0x38] sm:$0xff]
  %v37 = vld [vmem:[%s1] sm:$0xff]
  %v38 = vld [vmem:[%s1 + $0x8] sm:$0xff]
  %v39 = vld [vmem:[%s4] sm:$0x1]
  %v41 = vlaneseq
  %v42 = vshrl.u32 %v41, 7
  %v43 = vsub.s32 0, %v42
  %v44 = vrot.slane %v39, %v43
  %vm46 = vcmask 130048
  %v48 = vsel %vm46, %v29, 0
  %v51 = vsel %vm46, %v30, 0
  %v54 = vsel %vm46, %v31, 0
  %v57 = vsel %vm46, %v32, 0
  %v60 = vsel %vm46, %v33, 0
  %v63 = vsel %vm46, %v34, 0
  %v66 = vsel %vm46, %v35, 0
  %v69 = vsel %vm46, %v36, 0
  %71 = vmatprep.subr.mxu0 0.0
  %72 = vmatpush1.msra.mxu0 %v37
  %73 = vmatprep.subr.mxu0 0.0
  %74 = vmatpush1.msra.mxu0 %v38
  %75 = vmatprep.subr.mxu0 0.0
  %76 = vmatpush1.msra.mxu0 0.0
  %77 = vmatprep.subr.mxu0 0.0
  %78 = vmatpush1.msra.mxu0 0.0
  %79 = vmatprep.subr.mxu0 0.0
  %80 = vmatpush1.msra.mxu0 0.0
  %81 = vmatprep.subr.mxu0 0.0
  %82 = vmatpush1.msra.mxu0 0.0
  %83 = vmatprep.subr.mxu0 0.0
  %84 = vmatpush1.msra.mxu0 0.0
  %85 = vmatprep.subr.mxu0 0.0
  %86 = vmatpush1.msra.mxu0 0.0
  %87 = vmatprep.subr.mxu0 0.0
  %88 = vmatpush1.msra.mxu0 0.0
  %89 = vmatprep.subr.mxu0 0.0
  %90 = vmatpush1.msra.mxu0 0.0
  %91 = vmatprep.subr.mxu0 0.0
  %92 = vmatpush1.msra.mxu0 0.0
  %93 = vmatprep.subr.mxu0 0.0
  %94 = vmatpush1.msra.mxu0 0.0
  %95 = vmatprep.subr.mxu0 0.0
  %96 = vmatpush1.msra.mxu0 0.0
  %97 = vmatprep.subr.mxu0 0.0
  %98 = vmatpush1.msra.mxu0 0.0
  %99 = vmatprep.subr.mxu0 0.0
  %100 = vmatpush1.msra.mxu0 0.0
  %101 = vmatprep.subr.mxu0 0.0
  %102 = vmatpush1.msra.mxu0 0.0
  %103 = vmatprep.subr.mxu0 0.0
  %104 = vmatpush1.msra.mxu0 0.0
  %105 = vmatprep.subr.mxu0 0.0
  %106 = vmatpush1.msra.mxu0 0.0
  %107 = vmatprep.subr.mxu0 0.0
  %108 = vmatpush1.msra.mxu0 0.0
  %109 = vmatprep.subr.mxu0 0.0
  %110 = vmatpush1.msra.mxu0 0.0
  %111 = vmatprep.subr.mxu0 0.0
  %112 = vmatpush1.msra.mxu0 0.0
  %113 = vmatprep.subr.mxu0 0.0
  %114 = vmatpush1.msra.mxu0 0.0
  %115 = vmatprep.subr.mxu0 0.0
  %116 = vmatpush1.msra.mxu0 0.0
  %117 = vmatprep.subr.mxu0 0.0
  %118 = vmatpush1.msra.mxu0 0.0
  %119 = vmatprep.subr.mxu0 0.0
  %120 = vmatpush1.msra.mxu0 0.0
  %121 = vmatprep.subr.mxu0 0.0
  %122 = vmatpush1.msra.mxu0 0.0
  %123 = vmatprep.subr.mxu0 0.0
  %124 = vmatpush1.msra.mxu0 0.0
  %125 = vmatprep.subr.mxu0 0.0
  %126 = vmatpush1.msra.mxu0 0.0
  %127 = vmatprep.subr.mxu0 0.0
  %128 = vmatpush1.msra.mxu0 0.0
  %129 = vmatprep.subr.mxu0 0.0
  %130 = vmatpush1.msra.mxu0 0.0
  %131 = vmatprep.subr.mxu0 0.0
  %132 = vmatpush1.msra.mxu0 0.0
  %133 = vmatprep.subr.mxu0 0.0
  %134 = vmatpush1.msra.mxu0 0.0
  %135 = vmatprep.mubr.f32.mxu0 0.0
  %136 = vmatmul.mubr.f32.gmra.mrb[0].mxu0 %v48
  %v137 = vpop.f32.mrb[0].mxu0
  %v138 = vadd.f32 %v44, %v137
  %v139 = vpop.f32.mrb[0].mxu0
  %140 = vmatprep.mubr.f32.mxu0 0.0
  %141 = vmatmul.mubr.f32.gmra.mrb[0].mxu0 %v51
  %v142 = vpop.f32.mrb[0].mxu0
  %v143 = vadd.f32 %v44, %v142
  %v144 = vpop.f32.mrb[0].mxu0
  %145 = vmatprep.mubr.f32.mxu0 0.0
  %146 = vmatmul.mubr.f32.gmra.mrb[0].mxu0 %v54
  %v147 = vpop.f32.mrb[0].mxu0
  %v148 = vadd.f32 %v44, %v147
  %v149 = vpop.f32.mrb[0].mxu0
  %150 = vmatprep.mubr.f32.mxu0 0.0
  %151 = vmatmul.mubr.f32.gmra.mrb[0].mxu0 %v57
  %v152 = vpop.f32.mrb[0].mxu0
  %v153 = vadd.f32 %v44, %v152
  %v154 = vpop.f32.mrb[0].mxu0
  %155 = vmatprep.mubr.f32.mxu0 0.0
  %156 = vmatmul.mubr.f32.gmra.mrb[0].mxu0 %v60
  %v157 = vpop.f32.mrb[0].mxu0
  %v158 = vadd.f32 %v44, %v157
  %v159 = vpop.f32.mrb[0].mxu0
  %160 = vmatprep.mubr.f32.mxu0 0.0
  %161 = vmatmul.mubr.f32.gmra.mrb[0].mxu0 %v63
  %v162 = vpop.f32.mrb[0].mxu0
  %v163 = vadd.f32 %v44, %v162
  %v164 = vpop.f32.mrb[0].mxu0
  %165 = vmatprep.mubr.f32.mxu0 0.0
  %166 = vmatmul.mubr.f32.gmra.mrb[0].mxu0 %v66
  %v167 = vpop.f32.mrb[0].mxu0
  %v168 = vadd.f32 %v44, %v167
  %v169 = vpop.f32.mrb[0].mxu0
  %170 = vmatprep.mubr.f32.mxu0 0.0
  %171 = vmatmul.mubr.f32.gmra.mrb[0].mxu0 %v69
  %v172 = vpop.f32.mrb[0].mxu0
  %v173 = vadd.f32 %v44, %v172
  %v174 = vpop.f32.mrb[0].mxu0
  %175 = vdwg.mxu0
  %176 = vst [vmem:[#allocation2] sm:$0xff] %v138
  %177 = vst [vmem:[#allocation2 + $0x8] sm:$0xff] %v143
  %178 = vst [vmem:[#allocation2 + $0x10] sm:$0xff] %v148
  %179 = vst [vmem:[#allocation2 + $0x18] sm:$0xff] %v153
  %180 = vst [vmem:[#allocation2 + $0x20] sm:$0xff] %v158
  %181 = vst [vmem:[#allocation2 + $0x28] sm:$0xff] %v163
  %182 = vst [vmem:[#allocation2 + $0x30] sm:$0xff] %v168
  %183 = vst [vmem:[#allocation2 + $0x38] sm:$0xff] %v173
  %v184 = vld [vmem:[%s2] sm:$0xff]
  %v185 = vld [vmem:[%s2 + $0x8] sm:$0xff]
  %v186 = vld [vmem:[%s2 + $0x10] sm:$0xff]
  %v187 = vld [vmem:[%s2 + $0x18] sm:$0xff]
  %v188 = vld [vmem:[%s2 + $0x20] sm:$0xff]
  %v189 = vld [vmem:[%s2 + $0x28] sm:$0xff]
  %v190 = vld [vmem:[%s2 + $0x30] sm:$0xff]
  %v191 = vld [vmem:[%s2 + $0x38] sm:$0xff]
  %v192 = vld [vmem:[%s3] sm:$0xff]
  %v193 = vld [vmem:[%s3 + $0x8] sm:$0xff]
  %v194 = vld [vmem:[%s3 + $0x10] sm:$0xff]
  %v195 = vld [vmem:[%s3 + $0x18] sm:$0xff]
  %v196 = vld [vmem:[%s5] sm:$0x1]
  %v198 = vlaneseq
  %v199 = vshrl.u32 %v198, 7
  %v200 = vsub.s32 0, %v199
  %v201 = vrot.slane %v196, %v200
  %vm203 = vcmask 261120
  %v205 = vsel %vm203, 0.0, 0
  %207 = vmatprep.subr.mxu0 0.0
  %208 = vmatpush1.msra.mxu0 %v192
  %209 = vmatprep.subr.mxu0 0.0
  %210 = vmatpush1.msra.mxu0 %v193
  %211 = vmatprep.subr.mxu0 0.0
  %212 = vmatpush1.msra.mxu0 %v194
  %213 = vmatprep.subr.mxu0 0.0
  %214 = vmatpush1.msra.mxu0 %v195
  %215 = vmatprep.subr.mxu0 0.0
  %216 = vmatpush1.msra.mxu0 0.0
  %217 = vmatprep.subr.mxu0 0.0
  %218 = vmatpush1.msra.mxu0 0.0
  %219 = vmatprep.subr.mxu0 0.0
  %220 = vmatpush1.msra.mxu0 0.0
  %221 = vmatprep.subr.mxu0 0.0
  %222 = vmatpush1.msra.mxu0 0.0
  %223 = vmatprep.subr.mxu0 0.0
  %224 = vmatpush1.msra.mxu0 0.0
  %225 = vmatprep.subr.mxu0 0.0
  %226 = vmatpush1.msra.mxu0 0.0
  %227 = vmatprep.subr.mxu0 0.0
  %228 = vmatpush1.msra.mxu0 0.0
  %229 = vmatprep.subr.mxu0 0.0
  %230 = vmatpush1.msra.mxu0 0.0
  %231 = vmatprep.subr.mxu0 0.0
  %232 = vmatpush1.msra.mxu0 0.0
  %233 = vmatprep.subr.mxu0 0.0
  %234 = vmatpush1.msra.mxu0 0.0
  %235 = vmatprep.subr.mxu0 0.0
  %236 = vmatpush1.msra.mxu0 0.0
  %237 = vmatprep.subr.mxu0 0.0
  %238 = vmatpush1.msra.mxu0 0.0
  %239 = vmatprep.subr.mxu0 0.0
  %240 = vmatpush1.msra.mxu0 0.0
  %241 = vmatprep.subr.mxu0 0.0
  %242 = vmatpush1.msra.mxu0 0.0
  %243 = vmatprep.subr.mxu0 0.0
  %244 = vmatpush1.msra.mxu0 0.0
  %245 = vmatprep.subr.mxu0 0.0
  %246 = vmatpush1.msra.mxu0 0.0
  %247 = vmatprep.subr.mxu0 0.0
  %248 = vmatpush1.msra.mxu0 0.0
  %249 = vmatprep.subr.mxu0 0.0
  %250 = vmatpush1.msra.mxu0 0.0
  %251 = vmatprep.subr.mxu0 0.0
  %252 = vmatpush1.msra.mxu0 0.0
  %253 = vmatprep.subr.mxu0 0.0
  %254 = vmatpush1.msra.mxu0 0.0
  %255 = vmatprep.subr.mxu0 0.0
  %256 = vmatpush1.msra.mxu0 0.0
  %257 = vmatprep.subr.mxu0 0.0
  %258 = vmatpush1.msra.mxu0 0.0
  %259 = vmatprep.subr.mxu0 0.0
  %260 = vmatpush1.msra.mxu0 0.0
  %261 = vmatprep.subr.mxu0 0.0
  %262 = vmatpush1.msra.mxu0 0.0
  %263 = vmatprep.subr.mxu0 0.0
  %264 = vmatpush1.msra.mxu0 0.0
  %265 = vmatprep.subr.mxu0 0.0
  %266 = vmatpush1.msra.mxu0 0.0
  %267 = vmatprep.subr.mxu0 0.0
  %268 = vmatpush1.msra.mxu0 0.0
  %269 = vmatprep.subr.mxu0 0.0
  %270 = vmatpush1.msra.mxu0 0.0
  %271 = vmatprep.mubr.f32.mxu0 0.0
  %272 = vmatmul.mubr.f32.gmra.mrb[0].mxu0 %v205
  %v273 = vpop.f32.mrb[0].mxu0
  %v274 = vadd.f32 %v201, %v273
  %v275 = vpop.f32.mrb[0].mxu0
  %276 = vdwg.mxu0
  %v277 = vld [vmem:[#allocation2] sm:$0xff]
  %v278 = vadd.f32 %v277, 0.0
  %v279 = vxor.u32 %v278, 2147483648
  %v280 = vmul.f32 %v279, 1.442695
  %v281 = vpow.pop %v280
  %v282 = vadd.f32 %v281, 1.0
  %v283 = vrcp.pop %v282
  %v284 = vmul.f32 1.0, %v283
  %v285 = vtanh.pop %v278
  %v286 = vmul.f32 %v284, 0.0
  %288 = vrot.lane.b32.xlu0 %v285, 64
  %v289 = vpop.permute.xlu0 %288
  %v291 = vmul.f32 %v284, %v289
  %293 = vrot.lane.b32.xlu0 %v291, 32
  %v294 = vpop.permute.xlu0 %293
  %v296 = vadd.f32 %v286, %v294
  %v297 = vtanh.pop %v296
  %299 = vrot.lane.b32.xlu0 %v297, 64
  %v300 = vpop.permute.xlu0 %299
  %v302 = vmul.f32 %v284, %v300
  %304 = vrot.lane.b32.xlu0 %v302, 32
  %v305 = vpop.permute.xlu0 %304
  %v306 = vsel %vm203, %v305, 0
  %308 = vmatprep.subr.mxu0 %v185
  %309 = vmatpush1.msra.mxu0 %v184
  %310 = vmatprep.subr.mxu0 %v187
  %311 = vmatpush1.msra.mxu0 %v186
  %312 = vmatprep.subr.mxu0 %v189
  %313 = vmatpush1.msra.mxu0 %v188
  %314 = vmatprep.subr.mxu0 %v191
  %315 = vmatpush1.msra.mxu0 %v190
  %316 = vmatprep.subr.mxu0 0.0
  %317 = vmatpush1.msra.mxu0 0.0
  %318 = vmatprep.subr.mxu0 0.0
  %319 = vmatpush1.msra.mxu0 0.0
  %320 = vmatprep.subr.mxu0 0.0
  %321 = vmatpush1.msra.mxu0 0.0
  %322 = vmatprep.subr.mxu0 0.0
  %323 = vmatpush1.msra.mxu0 0.0
  %324 = vmatprep.subr.mxu0 0.0
  %325 = vmatpush1.msra.mxu0 0.0
  %326 = vmatprep.subr.mxu0 0.0
  %327 = vmatpush1.msra.mxu0 0.0
  %328 = vmatprep.subr.mxu0 0.0
  %329 = vmatpush1.msra.mxu0 0.0
  %330 = vmatprep.subr.mxu0 0.0
  %331 = vmatpush1.msra.mxu0 0.0
  %332 = vmatprep.subr.mxu0 0.0
  %333 = vmatpush1.msra.mxu0 0.0
  %334 = vmatprep.subr.mxu0 0.0
  %335 = vmatpush1.msra.mxu0 0.0
  %336 = vmatprep.subr.mxu0 0.0
  %337 = vmatpush1.msra.mxu0 0.0
  %338 = vmatprep.subr.mxu0 0.0
  %339 = vmatpush1.msra.mxu0 0.0
  %340 = vmatprep.subr.mxu0 0.0
  %341 = vmatpush1.msra.mxu0 0.0
  %342 = vmatprep.subr.mxu0 0.0
  %343 = vmatpush1.msra.mxu0 0.0
  %344 = vmatprep.subr.mxu0 0.0
  %345 = vmatpush1.msra.mxu0 0.0
  %346 = vmatprep.subr.mxu0 0.0
  %347 = vmatpush1.msra.mxu0 0.0
  %348 = vmatprep.subr.mxu0 0.0
  %349 = vmatpush1.msra.mxu0 0.0
  %350 = vmatprep.subr.mxu0 0.0
  %351 = vmatpush1.msra.mxu0 0.0
  %352 = vmatprep.subr.mxu0 0.0
  %353 = vmatpush1.msra.mxu0 0.0
  %354 = vmatprep.subr.mxu0 0.0
  %355 = vmatpush1.msra.mxu0 0.0
  %356 = vmatprep.subr.mxu0 0.0
  %357 = vmatpush1.msra.mxu0 0.0
  %358 = vmatprep.subr.mxu0 0.0
  %359 = vmatpush1.msra.mxu0 0.0
  %360 = vmatprep.subr.mxu0 0.0
  %361 = vmatpush1.msra.mxu0 0.0
  %362 = vmatprep.subr.mxu0 0.0
  %363 = vmatpush1.msra.mxu0 0.0
  %364 = vmatprep.subr.mxu0 0.0
  %365 = vmatpush1.msra.mxu0 0.0
  %366 = vmatprep.subr.mxu0 0.0
  %367 = vmatpush1.msra.mxu0 0.0
  %368 = vmatprep.subr.mxu0 0.0
  %369 = vmatpush1.msra.mxu0 0.0
  %370 = vmatprep.subr.mxu0 0.0
  %371 = vmatpush1.msra.mxu0 0.0
  %372 = vmatprep.mubr.f32.mxu0 0.0
  %373 = vmatmul.mubr.f32.gmra.mrb[0].mxu0 %v306
  %v374 = vpop.f32.mrb[0].mxu0
  %v375 = vadd.f32 0.0, %v374
  %v376 = vpop.f32.mrb[0].mxu0
  %v377 = vadd.f32 0.0, %v376
  %378 = vdwg.mxu0
  %v379 = vadd.f32 %v377, %v274
  %v380 = vxor.u32 %v379, 2147483648
  %v381 = vmul.f32 %v380, 1.442695
  %v382 = vpow.pop %v381
  %v383 = vadd.f32 %v382, 1.0
  %v384 = vrcp.pop %v383
  %v385 = vmul.f32 1.0, %v384
  %v386 = vtanh.pop %v379
  %v387 = vmul.f32 %v385, 0.0
  %389 = vrot.lane.b32.xlu0 %v386, 64
  %v390 = vpop.permute.xlu0 %389
  %v392 = vmul.f32 %v385, %v390
  %394 = vrot.lane.b32.xlu0 %v392, 32
  %v395 = vpop.permute.xlu0 %394
  %v397 = vadd.f32 %v387, %v395
  %v398 = vtanh.pop %v397
  %400 = vrot.lane.b32.xlu0 %v398, 64
  %v401 = vpop.permute.xlu0 %400
  %v403 = vmul.f32 %v385, %v401
  %405 = vrot.lane.b32.xlu0 %v403, 32
  %v406 = vpop.permute.xlu0 %405
  %408 = vst.msk [vmem:[#allocation3] sm:$0xff] %vm203, %v406
  %v409 = vsel %vm203, %v406, 0
  %411 = vmatprep.subr.mxu0 0.0
  %412 = vmatpush1.msra.mxu0 %v192
  %413 = vmatprep.subr.mxu0 0.0
  %414 = vmatpush1.msra.mxu0 %v193
  %415 = vmatprep.subr.mxu0 0.0
  %416 = vmatpush1.msra.mxu0 %v194
  %417 = vmatprep.subr.mxu0 0.0
  %418 = vmatpush1.msra.mxu0 %v195
  %419 = vmatprep.subr.mxu0 0.0
  %420 = vmatpush1.msra.mxu0 0.0
  %421 = vmatprep.subr.mxu0 0.0
  %422 = vmatpush1.msra.mxu0 0.0
  %423 = vmatprep.subr.mxu0 0.0
  %424 = vmatpush1.msra.mxu0 0.0
  %425 = vmatprep.subr.mxu0 0.0
  %426 = vmatpush1.msra.mxu0 0.0
  %427 = vmatprep.subr.mxu0 0.0
  %428 = vmatpush1.msra.mxu0 0.0
  %429 = vmatprep.subr.mxu0 0.0
  %430 = vmatpush1.msra.mxu0 0.0
  %431 = vmatprep.subr.mxu0 0.0
  %432 = vmatpush1.msra.mxu0 0.0
  %433 = vmatprep.subr.mxu0 0.0
  %434 = vmatpush1.msra.mxu0 0.0
  %435 = vmatprep.subr.mxu0 0.0
  %436 = vmatpush1.msra.mxu0 0.0
  %437 = vmatprep.subr.mxu0 0.0
  %438 = vmatpush1.msra.mxu0 0.0
  %439 = vmatprep.subr.mxu0 0.0
  %440 = vmatpush1.msra.mxu0 0.0
  %441 = vmatprep.subr.mxu0 0.0
  %442 = vmatpush1.msra.mxu0 0.0
  %443 = vmatprep.subr.mxu0 0.0
  %444 = vmatpush1.msra.mxu0 0.0
  %445 = vmatprep.subr.mxu0 0.0
  %446 = vmatpush1.msra.mxu0 0.0
  %447 = vmatprep.subr.mxu0 0.0
  %448 = vmatpush1.msra.mxu0 0.0
  %449 = vmatprep.subr.mxu0 0.0
  %450 = vmatpush1.msra.mxu0 0.0
  %451 = vmatprep.subr.mxu0 0.0
  %452 = vmatpush1.msra.mxu0 0.0
  %453 = vmatprep.subr.mxu0 0.0
  %454 = vmatpush1.msra.mxu0 0.0
  %455 = vmatprep.subr.mxu0 0.0
  %456 = vmatpush1.msra.mxu0 0.0
  %457 = vmatprep.subr.mxu0 0.0
  %458 = vmatpush1.msra.mxu0 0.0
  %459 = vmatprep.subr.mxu0 0.0
  %460 = vmatpush1.msra.mxu0 0.0
  %461 = vmatprep.subr.mxu0 0.0
  %462 = vmatpush1.msra.mxu0 0.0
  %463 = vmatprep.subr.mxu0 0.0
  %464 = vmatpush1.msra.mxu0 0.0
  %465 = vmatprep.subr.mxu0 0.0
  %466 = vmatpush1.msra.mxu0 0.0
  %467 = vmatprep.subr.mxu0 0.0
  %468 = vmatpush1.msra.mxu0 0.0
  %469 = vmatprep.subr.mxu0 0.0
  %470 = vmatpush1.msra.mxu0 0.0
  %471 = vmatprep.subr.mxu0 0.0
  %472 = vmatpush1.msra.mxu0 0.0
  %473 = vmatprep.subr.mxu0 0.0
  %474 = vmatpush1.msra.mxu0 0.0
  %475 = vmatprep.mubr.f32.mxu0 0.0
  %476 = vmatmul.mubr.f32.gmra.mrb[0].mxu0 %v409
  %v477 = vpop.f32.mrb[0].mxu0
  %v478 = vadd.f32 %v201, %v477
  %v479 = vpop.f32.mrb[0].mxu0
  %480 = vdwg.mxu0
  %s481 = scalar_lea.vmem [#allocation2], 8
  %v482 = vld [vmem:[%s481] sm:$0xff]
  %v483 = vadd.f32 %v482, %v375
  %v484 = vxor.u32 %v483, 2147483648
  %v485 = vmul.f32 %v484, 1.442695
  %v486 = vpow.pop %v485
  %v487 = vadd.f32 %v486, 1.0
  %v488 = vrcp.pop %v487
  %v489 = vmul.f32 1.0, %v488
  %v490 = vtanh.pop %v483
  %v491 = vmul.f32 %v489, %v296
  %493 = vrot.lane.b32.xlu0 %v490, 64
  %v494 = vpop.permute.xlu0 %493
  %v496 = vmul.f32 %v489, %v494
  %498 = vrot.lane.b32.xlu0 %v496, 32
  %v499 = vpop.permute.xlu0 %498
  %v501 = vadd.f32 %v491, %v499
  %v502 = vtanh.pop %v501
  %504 = vrot.lane.b32.xlu0 %v502, 64
  %v505 = vpop.permute.xlu0 %504
  %v507 = vmul.f32 %v489, %v505
  %509 = vrot.lane.b32.xlu0 %v507, 32
  %v510 = vpop.permute.xlu0 %509
  %v511 = vsel %vm203, %v510, 0
  %513 = vmatprep.subr.mxu0 %v185
  %514 = vmatpush1.msra.mxu0 %v184
  %515 = vmatprep.subr.mxu0 %v187
  %516 = vmatpush1.msra.mxu0 %v186
  %517 = vmatprep.subr.mxu0 %v189
  %518 = vmatpush1.msra.mxu0 %v188
  %519 = vmatprep.subr.mxu0 %v191
  %520 = vmatpush1.msra.mxu0 %v190
  %521 = vmatprep.subr.mxu0 0.0
  %522 = vmatpush1.msra.mxu0 0.0
  %523 = vmatprep.subr.mxu0 0.0
  %524 = vmatpush1.msra.mxu0 0.0
  %525 = vmatprep.subr.mxu0 0.0
  %526 = vmatpush1.msra.mxu0 0.0
  %527 = vmatprep.subr.mxu0 0.0
  %528 = vmatpush1.msra.mxu0 0.0
  %529 = vmatprep.subr.mxu0 0.0
  %530 = vmatpush1.msra.mxu0 0.0
  %531 = vmatprep.subr.mxu0 0.0
  %532 = vmatpush1.msra.mxu0 0.0
  %533 = vmatprep.subr.mxu0 0.0
  %534 = vmatpush1.msra.mxu0 0.0
  %535 = vmatprep.subr.mxu0 0.0
  %536 = vmatpush1.msra.mxu0 0.0
  %537 = vmatprep.subr.mxu0 0.0
  %538 = vmatpush1.msra.mxu0 0.0
  %539 = vmatprep.subr.mxu0 0.0
  %540 = vmatpush1.msra.mxu0 0.0
  %541 = vmatprep.subr.mxu0 0.0
  %542 = vmatpush1.msra.mxu0 0.0
  %543 = vmatprep.subr.mxu0 0.0
  %544 = vmatpush1.msra.mxu0 0.0
  %545 = vmatprep.subr.mxu0 0.0
  %546 = vmatpush1.msra.mxu0 0.0
  %547 = vmatprep.subr.mxu0 0.0
  %548 = vmatpush1.msra.mxu0 0.0
  %549 = vmatprep.subr.mxu0 0.0
  %550 = vmatpush1.msra.mxu0 0.0
  %551 = vmatprep.subr.mxu0 0.0
  %552 = vmatpush1.msra.mxu0 0.0
  %553 = vmatprep.subr.mxu0 0.0
  %554 = vmatpush1.msra.mxu0 0.0
  %555 = vmatprep.subr.mxu0 0.0
  %556 = vmatpush1.msra.mxu0 0.0
  %557 = vmatprep.subr.mxu0 0.0
  %558 = vmatpush1.msra.mxu0 0.0
  %559 = vmatprep.subr.mxu0 0.0
  %560 = vmatpush1.msra.mxu0 0.0
  %561 = vmatprep.subr.mxu0 0.0
  %562 = vmatpush1.msra.mxu0 0.0
  %563 = vmatprep.subr.mxu0 0.0
  %564 = vmatpush1.msra.mxu0 0.0
  %565 = vmatprep.subr.mxu0 0.0
  %566 = vmatpush1.msra.mxu0 0.0
  %567 = vmatprep.subr.mxu0 0.0
  %568 = vmatpush1.msra.mxu0 0.0
  %569 = vmatprep.subr.mxu0 0.0
  %570 = vmatpush1.msra.mxu0 0.0
  %571 = vmatprep.subr.mxu0 0.0
  %572 = vmatpush1.msra.mxu0 0.0
  %573 = vmatprep.subr.mxu0 0.0
  %574 = vmatpush1.msra.mxu0 0.0
  %575 = vmatprep.subr.mxu0 0.0
  %576 = vmatpush1.msra.mxu0 0.0
  %577 = vmatprep.mubr.f32.mxu0 0.0
  %578 = vmatmul.mubr.f32.gmra.mrb[0].mxu0 %v511
  %v579 = vpop.f32.mrb[0].mxu0
  %v580 = vadd.f32 0.0, %v579
  %v581 = vpop.f32.mrb[0].mxu0
  %v582 = vadd.f32 0.0, %v581
  %583 = vdwg.mxu0
  %v584 = vadd.f32 %v582, %v478
  %v585 = vxor.u32 %v584, 2147483648
  %v586 = vmul.f32 %v585, 1.442695
  %v587 = vpow.pop %v586
  %v588 = vadd.f32 %v587, 1.0
  %v589 = vrcp.pop %v588
  %v590 = vmul.f32 1.0, %v589
  %v591 = vtanh.pop %v584
  %v592 = vmul.f32 %v590, %v397
  %594 = vrot.lane.b32.xlu0 %v591, 64
  %v595 = vpop.permute.xlu0 %594
  %v597 = vmul.f32 %v590, %v595
  %599 = vrot.lane.b32.xlu0 %v597, 32
  %v600 = vpop.permute.xlu0 %599
  %v602 = vadd.f32 %v592, %v600
  %v603 = vtanh.pop %v602
  %605 = vrot.lane.b32.xlu0 %v603, 64
  %v606 = vpop.permute.xlu0 %605
  %v608 = vmul.f32 %v590, %v606
  %610 = vrot.lane.b32.xlu0 %v608, 32
  %v611 = vpop.permute.xlu0 %610
  %s613 = scalar_lea.vmem [#allocation3], 8
  %614 = vst.msk [vmem:[%s613] sm:$0xff] %vm203, %v611
  %v615 = vsel %vm203, %v611, 0
  %617 = vmatprep.subr.mxu0 0.0
  %618 = vmatpush1.msra.mxu0 %v192
  %619 = vmatprep.subr.mxu0 0.0
  %620 = vmatpush1.msra.mxu0 %v193
  %621 = vmatprep.subr.mxu0 0.0
  %622 = vmatpush1.msra.mxu0 %v194
  %623 = vmatprep.subr.mxu0 0.0
  %624 = vmatpush1.msra.mxu0 %v195
  %625 = vmatprep.subr.mxu0 0.0
  %626 = vmatpush1.msra.mxu0 0.0
  %627 = vmatprep.subr.mxu0 0.0
  %628 = vmatpush1.msra.mxu0 0.0
  %629 = vmatprep.subr.mxu0 0.0
  %630 = vmatpush1.msra.mxu0 0.0
  %631 = vmatprep.subr.mxu0 0.0
  %632 = vmatpush1.msra.mxu0 0.0
  %633 = vmatprep.subr.mxu0 0.0
  %634 = vmatpush1.msra.mxu0 0.0
  %635 = vmatprep.subr.mxu0 0.0
  %636 = vmatpush1.msra.mxu0 0.0
  %637 = vmatprep.subr.mxu0 0.0
  %638 = vmatpush1.msra.mxu0 0.0
  %639 = vmatprep.subr.mxu0 0.0
  %640 = vmatpush1.msra.mxu0 0.0
  %641 = vmatprep.subr.mxu0 0.0
  %642 = vmatpush1.msra.mxu0 0.0
  %643 = vmatprep.subr.mxu0 0.0
  %644 = vmatpush1.msra.mxu0 0.0
  %645 = vmatprep.subr.mxu0 0.0
  %646 = vmatpush1.msra.mxu0 0.0
  %647 = vmatprep.subr.mxu0 0.0
  %648 = vmatpush1.msra.mxu0 0.0
  %649 = vmatprep.subr.mxu0 0.0
  %650 = vmatpush1.msra.mxu0 0.0
  %651 = vmatprep.subr.mxu0 0.0
  %652 = vmatpush1.msra.mxu0 0.0
  %653 = vmatprep.subr.mxu0 0.0
  %654 = vmatpush1.msra.mxu0 0.0
  %655 = vmatprep.subr.mxu0 0.0
  %656 = vmatpush1.msra.mxu0 0.0
  %657 = vmatprep.subr.mxu0 0.0
  %658 = vmatpush1.msra.mxu0 0.0
  %659 = vmatprep.subr.mxu0 0.0
  %660 = vmatpush1.msra.mxu0 0.0
  %661 = vmatprep.subr.mxu0 0.0
  %662 = vmatpush1.msra.mxu0 0.0
  %663 = vmatprep.subr.mxu0 0.0
  %664 = vmatpush1.msra.mxu0 0.0
  %665 = vmatprep.subr.mxu0 0.0
  %666 = vmatpush1.msra.mxu0 0.0
  %667 = vmatprep.subr.mxu0 0.0
  %668 = vmatpush1.msra.mxu0 0.0
  %669 = vmatprep.subr.mxu0 0.0
  %670 = vmatpush1.msra.mxu0 0.0
  %671 = vmatprep.subr.mxu0 0.0
  %672 = vmatpush1.msra.mxu0 0.0
  %673 = vmatprep.subr.mxu0 0.0
  %674 = vmatpush1.msra.mxu0 0.0
  %675 = vmatprep.subr.mxu0 0.0
  %676 = vmatpush1.msra.mxu0 0.0
  %677 = vmatprep.subr.mxu0 0.0
  %678 = vmatpush1.msra.mxu0 0.0
  %679 = vmatprep.subr.mxu0 0.0
  %680 = vmatpush1.msra.mxu0 0.0
  %681 = vmatprep.mubr.f32.mxu0 0.0
  %682 = vmatmul.mubr.f32.gmra.mrb[0].mxu0 %v615
  %v683 = vpop.f32.mrb[0].mxu0
  %v684 = vadd.f32 %v201, %v683
  %v685 = vpop.f32.mrb[0].mxu0
  %686 = vdwg.mxu0
  %s687 = scalar_lea.vmem [#allocation2], 16
  %v688 = vld [vmem:[%s687] sm:$0xff]
  %v689 = vadd.f32 %v688, %v580
  %v690 = vxor.u32 %v689, 2147483648
  %v691 = vmul.f32 %v690, 1.442695
  %v692 = vpow.pop %v691
  %v693 = vadd.f32 %v692, 1.0
  %v694 = vrcp.pop %v693
  %v695 = vmul.f32 1.0, %v694
  %v696 = vtanh.pop %v689
  %v697 = vmul.f32 %v695, %v501
  %699 = vrot.lane.b32.xlu0 %v696, 64
  %v700 = vpop.permute.xlu0 %699
  %v702 = vmul.f32 %v695, %v700
  %704 = vrot.lane.b32.xlu0 %v702, 32
  %v705 = vpop.permute.xlu0 %704
  %v707 = vadd.f32 %v697, %v705
  %v708 = vtanh.pop %v707
  %710 = vrot.lane.b32.xlu0 %v708, 64
  %v711 = vpop.permute.xlu0 %710
  %v713 = vmul.f32 %v695, %v711
  %715 = vrot.lane.b32.xlu0 %v713, 32
  %v716 = vpop.permute.xlu0 %715
  %v717 = vsel %vm203, %v716, 0
  %719 = vmatprep.subr.mxu0 %v185
  %720 = vmatpush1.msra.mxu0 %v184
  %721 = vmatprep.subr.mxu0 %v187
  %722 = vmatpush1.msra.mxu0 %v186
  %723 = vmatprep.subr.mxu0 %v189
  %724 = vmatpush1.msra.mxu0 %v188
  %725 = vmatprep.subr.mxu0 %v191
  %726 = vmatpush1.msra.mxu0 %v190
  %727 = vmatprep.subr.mxu0 0.0
  %728 = vmatpush1.msra.mxu0 0.0
  %729 = vmatprep.subr.mxu0 0.0
  %730 = vmatpush1.msra.mxu0 0.0
  %731 = vmatprep.subr.mxu0 0.0
  %732 = vmatpush1.msra.mxu0 0.0
  %733 = vmatprep.subr.mxu0 0.0
  %734 = vmatpush1.msra.mxu0 0.0
  %735 = vmatprep.subr.mxu0 0.0
  %736 = vmatpush1.msra.mxu0 0.0
  %737 = vmatprep.subr.mxu0 0.0
  %738 = vmatpush1.msra.mxu0 0.0
  %739 = vmatprep.subr.mxu0 0.0
  %740 = vmatpush1.msra.mxu0 0.0
  %741 = vmatprep.subr.mxu0 0.0
  %742 = vmatpush1.msra.mxu0 0.0
  %743 = vmatprep.subr.mxu0 0.0
  %744 = vmatpush1.msra.mxu0 0.0
  %745 = vmatprep.subr.mxu0 0.0
  %746 = vmatpush1.msra.mxu0 0.0
  %747 = vmatprep.subr.mxu0 0.0
  %748 = vmatpush1.msra.mxu0 0.0
  %749 = vmatprep.subr.mxu0 0.0
  %750 = vmatpush1.msra.mxu0 0.0
  %751 = vmatprep.subr.mxu0 0.0
  %752 = vmatpush1.msra.mxu0 0.0
  %753 = vmatprep.subr.mxu0 0.0
  %754 = vmatpush1.msra.mxu0 0.0
  %755 = vmatprep.subr.mxu0 0.0
  %756 = vmatpush1.msra.mxu0 0.0
  %757 = vmatprep.subr.mxu0 0.0
  %758 = vmatpush1.msra.mxu0 0.0
  %759 = vmatprep.subr.mxu0 0.0
  %760 = vmatpush1.msra.mxu0 0.0
  %761 = vmatprep.subr.mxu0 0.0
  %762 = vmatpush1.msra.mxu0 0.0
  %763 = vmatprep.subr.mxu0 0.0
  %764 = vmatpush1.msra.mxu0 0.0
  %765 = vmatprep.subr.mxu0 0.0
  %766 = vmatpush1.msra.mxu0 0.0
  %767 = vmatprep.subr.mxu0 0.0
  %768 = vmatpush1.msra.mxu0 0.0
  %769 = vmatprep.subr.mxu0 0.0
  %770 = vmatpush1.msra.mxu0 0.0
  %771 = vmatprep.subr.mxu0 0.0
  %772 = vmatpush1.msra.mxu0 0.0
  %773 = vmatprep.subr.mxu0 0.0
  %774 = vmatpush1.msra.mxu0 0.0
  %775 = vmatprep.subr.mxu0 0.0
  %776 = vmatpush1.msra.mxu0 0.0
  %777 = vmatprep.subr.mxu0 0.0
  %778 = vmatpush1.msra.mxu0 0.0
  %779 = vmatprep.subr.mxu0 0.0
  %780 = vmatpush1.msra.mxu0 0.0
  %781 = vmatprep.subr.mxu0 0.0
  %782 = vmatpush1.msra.mxu0 0.0
  %783 = vmatprep.mubr.f32.mxu0 0.0
  %784 = vmatmul.mubr.f32.gmra.mrb[0].mxu0 %v717
  %v785 = vpop.f32.mrb[0].mxu0
  %v786 = vadd.f32 0.0, %v785
  %v787 = vpop.f32.mrb[0].mxu0
  %v788 = vadd.f32 0.0, %v787
  %789 = vdwg.mxu0
  %v790 = vadd.f32 %v788, %v684
  %v791 = vxor.u32 %v790, 2147483648
  %v792 = vmul.f32 %v791, 1.442695
  %v793 = vpow.pop %v792
  %v794 = vadd.f32 %v793, 1.0
  %v795 = vrcp.pop %v794
  %v796 = vmul.f32 1.0, %v795
  %v797 = vtanh.pop %v790
  %v798 = vmul.f32 %v796, %v602
  %800 = vrot.lane.b32.xlu0 %v797, 64
  %v801 = vpop.permute.xlu0 %800
  %v803 = vmul.f32 %v796, %v801
  %805 = vrot.lane.b32.xlu0 %v803, 32
  %v806 = vpop.permute.xlu0 %805
  %v808 = vadd.f32 %v798, %v806
  %v809 = vtanh.pop %v808
  %811 = vrot.lane.b32.xlu0 %v809, 64
  %v812 = vpop.permute.xlu0 %811
  %v814 = vmul.f32 %v796, %v812
  %816 = vrot.lane.b32.xlu0 %v814, 32
  %v817 = vpop.permute.xlu0 %816
  %s819 = scalar_lea.vmem [#allocation3], 16
  %820 = vst.msk [vmem:[%s819] sm:$0xff] %vm203, %v817
  %v821 = vsel %vm203, %v817, 0
  %823 = vmatprep.subr.mxu0 0.0
  %824 = vmatpush1.msra.mxu0 %v192
  %825 = vmatprep.subr.mxu0 0.0
  %826 = vmatpush1.msra.mxu0 %v193
  %827 = vmatprep.subr.mxu0 0.0
  %828 = vmatpush1.msra.mxu0 %v194
  %829 = vmatprep.subr.mxu0 0.0
  %830 = vmatpush1.msra.mxu0 %v195
  %831 = vmatprep.subr.mxu0 0.0
  %832 = vmatpush1.msra.mxu0 0.0
  %833 = vmatprep.subr.mxu0 0.0
  %834 = vmatpush1.msra.mxu0 0.0
  %835 = vmatprep.subr.mxu0 0.0
  %836 = vmatpush1.msra.mxu0 0.0
  %837 = vmatprep.subr.mxu0 0.0
  %838 = vmatpush1.msra.mxu0 0.0
  %839 = vmatprep.subr.mxu0 0.0
  %840 = vmatpush1.msra.mxu0 0.0
  %841 = vmatprep.subr.mxu0 0.0
  %842 = vmatpush1.msra.mxu0 0.0
  %843 = vmatprep.subr.mxu0 0.0
  %844 = vmatpush1.msra.mxu0 0.0
  %845 = vmatprep.subr.mxu0 0.0
  %846 = vmatpush1.msra.mxu0 0.0
  %847 = vmatprep.subr.mxu0 0.0
  %848 = vmatpush1.msra.mxu0 0.0
  %849 = vmatprep.subr.mxu0 0.0
  %850 = vmatpush1.msra.mxu0 0.0
  %851 = vmatprep.subr.mxu0 0.0
  %852 = vmatpush1.msra.mxu0 0.0
  %853 = vmatprep.subr.mxu0 0.0
  %854 = vmatpush1.msra.mxu0 0.0
  %855 = vmatprep.subr.mxu0 0.0
  %856 = vmatpush1.msra.mxu0 0.0
  %857 = vmatprep.subr.mxu0 0.0
  %858 = vmatpush1.msra.mxu0 0.0
  %859 = vmatprep.subr.mxu0 0.0
  %860 = vmatpush1.msra.mxu0 0.0
  %861 = vmatprep.subr.mxu0 0.0
  %862 = vmatpush1.msra.mxu0 0.0
  %863 = vmatprep.subr.mxu0 0.0
  %864 = vmatpush1.msra.mxu0 0.0
  %865 = vmatprep.subr.mxu0 0.0
  %866 = vmatpush1.msra.mxu0 0.0
  %867 = vmatprep.subr.mxu0 0.0
  %868 = vmatpush1.msra.mxu0 0.0
  %869 = vmatprep.subr.mxu0 0.0
  %870 = vmatpush1.msra.mxu0 0.0
  %871 = vmatprep.subr.mxu0 0.0
  %872 = vmatpush1.msra.mxu0 0.0
  %873 = vmatprep.subr.mxu0 0.0
  %874 = vmatpush1.msra.mxu0 0.0
  %875 = vmatprep.subr.mxu0 0.0
  %876 = vmatpush1.msra.mxu0 0.0
  %877 = vmatprep.subr.mxu0 0.0
  %878 = vmatpush1.msra.mxu0 0.0
  %879 = vmatprep.subr.mxu0 0.0
  %880 = vmatpush1.msra.mxu0 0.0
  %881 = vmatprep.subr.mxu0 0.0
  %882 = vmatpush1.msra.mxu0 0.0
  %883 = vmatprep.subr.mxu0 0.0
  %884 = vmatpush1.msra.mxu0 0.0
  %885 = vmatprep.subr.mxu0 0.0
  %886 = vmatpush1.msra.mxu0 0.0
  %887 = vmatprep.mubr.f32.mxu0 0.0
  %888 = vmatmul.mubr.f32.gmra.mrb[0].mxu0 %v821
  %v889 = vpop.f32.mrb[0].mxu0
  %v890 = vadd.f32 %v201, %v889
  %v891 = vpop.f32.mrb[0].mxu0
  %892 = vdwg.mxu0
  %s893 = scalar_lea.vmem [#allocation2], 24
  %v894 = vld [vmem:[%s893] sm:$0xff]
  %v895 = vadd.f32 %v894, %v786
  %v896 = vxor.u32 %v895, 2147483648
  %v897 = vmul.f32 %v896, 1.442695
  %v898 = vpow.pop %v897
  %v899 = vadd.f32 %v898, 1.0
  %v900 = vrcp.pop %v899
  %v901 = vmul.f32 1.0, %v900
  %v902 = vtanh.pop %v895
  %v903 = vmul.f32 %v901, %v707
  %905 = vrot.lane.b32.xlu0 %v902, 64
  %v906 = vpop.permute.xlu0 %905
  %v908 = vmul.f32 %v901, %v906
  %910 = vrot.lane.b32.xlu0 %v908, 32
  %v911 = vpop.permute.xlu0 %910
  %v913 = vadd.f32 %v903, %v911
  %v914 = vtanh.pop %v913
  %916 = vrot.lane.b32.xlu0 %v914, 64
  %v917 = vpop.permute.xlu0 %916
  %v919 = vmul.f32 %v901, %v917
  %921 = vrot.lane.b32.xlu0 %v919, 32
  %v922 = vpop.permute.xlu0 %921
  %v923 = vsel %vm203, %v922, 0
  %925 = vmatprep.subr.mxu0 %v185
  %926 = vmatpush1.msra.mxu0 %v184
  %927 = vmatprep.subr.mxu0 %v187
  %928 = vmatpush1.msra.mxu0 %v186
  %929 = vmatprep.subr.mxu0 %v189
  %930 = vmatpush1.msra.mxu0 %v188
  %931 = vmatprep.subr.mxu0 %v191
  %932 = vmatpush1.msra.mxu0 %v190
  %933 = vmatprep.subr.mxu0 0.0
  %934 = vmatpush1.msra.mxu0 0.0
  %935 = vmatprep.subr.mxu0 0.0
  %936 = vmatpush1.msra.mxu0 0.0
  %937 = vmatprep.subr.mxu0 0.0
  %938 = vmatpush1.msra.mxu0 0.0
  %939 = vmatprep.subr.mxu0 0.0
  %940 = vmatpush1.msra.mxu0 0.0
  %941 = vmatprep.subr.mxu0 0.0
  %942 = vmatpush1.msra.mxu0 0.0
  %943 = vmatprep.subr.mxu0 0.0
  %944 = vmatpush1.msra.mxu0 0.0
  %945 = vmatprep.subr.mxu0 0.0
  %946 = vmatpush1.msra.mxu0 0.0
  %947 = vmatprep.subr.mxu0 0.0
  %948 = vmatpush1.msra.mxu0 0.0
  %949 = vmatprep.subr.mxu0 0.0
  %950 = vmatpush1.msra.mxu0 0.0
  %951 = vmatprep.subr.mxu0 0.0
  %952 = vmatpush1.msra.mxu0 0.0
  %953 = vmatprep.subr.mxu0 0.0
  %954 = vmatpush1.msra.mxu0 0.0
  %955 = vmatprep.subr.mxu0 0.0
  %956 = vmatpush1.msra.mxu0 0.0
  %957 = vmatprep.subr.mxu0 0.0
  %958 = vmatpush1.msra.mxu0 0.0
  %959 = vmatprep.subr.mxu0 0.0
  %960 = vmatpush1.msra.mxu0 0.0
  %961 = vmatprep.subr.mxu0 0.0
  %962 = vmatpush1.msra.mxu0 0.0
  %963 = vmatprep.subr.mxu0 0.0
  %964 = vmatpush1.msra.mxu0 0.0
  %965 = vmatprep.subr.mxu0 0.0
  %966 = vmatpush1.msra.mxu0 0.0
  %967 = vmatprep.subr.mxu0 0.0
  %968 = vmatpush1.msra.mxu0 0.0
  %969 = vmatprep.subr.mxu0 0.0
  %970 = vmatpush1.msra.mxu0 0.0
  %971 = vmatprep.subr.mxu0 0.0
  %972 = vmatpush1.msra.mxu0 0.0
  %973 = vmatprep.subr.mxu0 0.0
  %974 = vmatpush1.msra.mxu0 0.0
  %975 = vmatprep.subr.mxu0 0.0
  %976 = vmatpush1.msra.mxu0 0.0
  %977 = vmatprep.subr.mxu0 0.0
  %978 = vmatpush1.msra.mxu0 0.0
  %979 = vmatprep.subr.mxu0 0.0
  %980 = vmatpush1.msra.mxu0 0.0
  %981 = vmatprep.subr.mxu0 0.0
  %982 = vmatpush1.msra.mxu0 0.0
  %983 = vmatprep.subr.mxu0 0.0
  %984 = vmatpush1.msra.mxu0 0.0
  %985 = vmatprep.subr.mxu0 0.0
  %986 = vmatpush1.msra.mxu0 0.0
  %987 = vmatprep.subr.mxu0 0.0
  %988 = vmatpush1.msra.mxu0 0.0
  %989 = vmatprep.mubr.f32.mxu0 0.0
  %990 = vmatmul.mubr.f32.gmra.mrb[0].mxu0 %v923
  %v991 = vpop.f32.mrb[0].mxu0
  %v992 = vadd.f32 0.0, %v991
  %v993 = vpop.f32.mrb[0].mxu0
  %v994 = vadd.f32 0.0, %v993
  %995 = vdwg.mxu0
  %v996 = vadd.f32 %v994, %v890
  %v997 = vxor.u32 %v996, 2147483648
  %v998 = vmul.f32 %v997, 1.442695
  %v999 = vpow.pop %v998
  %v1000 = vadd.f32 %v999, 1.0
  %v1001 = vrcp.pop %v1000
  %v1002 = vmul.f32 1.0, %v1001
  %v1003 = vtanh.pop %v996
  %v1004 = vmul.f32 %v1002, %v808
  %1006 = vrot.lane.b32.xlu0 %v1003, 64
  %v1007 = vpop.permute.xlu0 %1006
  %v1009 = vmul.f32 %v1002, %v1007
  %1011 = vrot.lane.b32.xlu0 %v1009, 32
  %v1012 = vpop.permute.xlu0 %1011
  %v1014 = vadd.f32 %v1004, %v1012
  %v1015 = vtanh.pop %v1014
  %1017 = vrot.lane.b32.xlu0 %v1015, 64
  %v1018 = vpop.permute.xlu0 %1017
  %v1020 = vmul.f32 %v1002, %v1018
  %1022 = vrot.lane.b32.xlu0 %v1020, 32
  %v1023 = vpop.permute.xlu0 %1022
  %s1025 = scalar_lea.vmem [#allocation3], 24
  %1026 = vst.msk [vmem:[%s1025] sm:$0xff] %vm203, %v1023
  %v1027 = vsel %vm203, %v1023, 0
  %1029 = vmatprep.subr.mxu0 0.0
  %1030 = vmatpush1.msra.mxu0 %v192
  %1031 = vmatprep.subr.mxu0 0.0
  %1032 = vmatpush1.msra.mxu0 %v193
  %1033 = vmatprep.subr.mxu0 0.0
  %1034 = vmatpush1.msra.mxu0 %v194
  %1035 = vmatprep.subr.mxu0 0.0
  %1036 = vmatpush1.msra.mxu0 %v195
  %1037 = vmatprep.subr.mxu0 0.0
  %1038 = vmatpush1.msra.mxu0 0.0
  %1039 = vmatprep.subr.mxu0 0.0
  %1040 = vmatpush1.msra.mxu0 0.0
  %1041 = vmatprep.subr.mxu0 0.0
  %1042 = vmatpush1.msra.mxu0 0.0
  %1043 = vmatprep.subr.mxu0 0.0
  %1044 = vmatpush1.msra.mxu0 0.0
  %1045 = vmatprep.subr.mxu0 0.0
  %1046 = vmatpush1.msra.mxu0 0.0
  %1047 = vmatprep.subr.mxu0 0.0
  %1048 = vmatpush1.msra.mxu0 0.0
  %1049 = vmatprep.subr.mxu0 0.0
  %1050 = vmatpush1.msra.mxu0 0.0
  %1051 = vmatprep.subr.mxu0 0.0
  %1052 = vmatpush1.msra.mxu0 0.0
  %1053 = vmatprep.subr.mxu0 0.0
  %1054 = vmatpush1.msra.mxu0 0.0
  %1055 = vmatprep.subr.mxu0 0.0
  %1056 = vmatpush1.msra.mxu0 0.0
  %1057 = vmatprep.subr.mxu0 0.0
  %1058 = vmatpush1.msra.mxu0 0.0
  %1059 = vmatprep.subr.mxu0 0.0
  %1060 = vmatpush1.msra.mxu0 0.0
  %1061 = vmatprep.subr.mxu0 0.0
  %1062 = vmatpush1.msra.mxu0 0.0
  %1063 = vmatprep.subr.mxu0 0.0
  %1064 = vmatpush1.msra.mxu0 0.0
  %1065 = vmatprep.subr.mxu0 0.0
  %1066 = vmatpush1.msra.mxu0 0.0
  %1067 = vmatprep.subr.mxu0 0.0
  %1068 = vmatpush1.msra.mxu0 0.0
  %1069 = vmatprep.subr.mxu0 0.0
  %1070 = vmatpush1.msra.mxu0 0.0
  %1071 = vmatprep.subr.mxu0 0.0
  %1072 = vmatpush1.msra.mxu0 0.0
  %1073 = vmatprep.subr.mxu0 0.0
  %1074 = vmatpush1.msra.mxu0 0.0
  %1075 = vmatprep.subr.mxu0 0.0
  %1076 = vmatpush1.msra.mxu0 0.0
  %1077 = vmatprep.subr.mxu0 0.0
  %1078 = vmatpush1.msra.mxu0 0.0
  %1079 = vmatprep.subr.mxu0 0.0
  %1080 = vmatpush1.msra.mxu0 0.0
  %1081 = vmatprep.subr.mxu0 0.0
  %1082 = vmatpush1.msra.mxu0 0.0
  %1083 = vmatprep.subr.mxu0 0.0
  %1084 = vmatpush1.msra.mxu0 0.0
  %1085 = vmatprep.subr.mxu0 0.0
  %1086 = vmatpush1.msra.mxu0 0.0
  %1087 = vmatprep.subr.mxu0 0.0
  %1088 = vmatpush1.msra.mxu0 0.0
  %1089 = vmatprep.subr.mxu0 0.0
  %1090 = vmatpush1.msra.mxu0 0.0
  %1091 = vmatprep.subr.mxu0 0.0
  %1092 = vmatpush1.msra.mxu0 0.0
  %1093 = vmatprep.mubr.f32.mxu0 0.0
  %1094 = vmatmul.mubr.f32.gmra.mrb[0].mxu0 %v1027
  %v1095 = vpop.f32.mrb[0].mxu0
  %v1096 = vadd.f32 %v201, %v1095
  %v1097 = vpop.f32.mrb[0].mxu0
  %1098 = vdwg.mxu0
  %s1099 = scalar_lea.vmem [#allocation2], 32
  %v1100 = vld [vmem:[%s1099] sm:$0xff]
  %v1101 = vadd.f32 %v1100, %v992
  %v1102 = vxor.u32 %v1101, 2147483648
  %v1103 = vmul.f32 %v1102, 1.442695
  %v1104 = vpow.pop %v1103
  %v1105 = vadd.f32 %v1104, 1.0
  %v1106 = vrcp.pop %v1105
  %v1107 = vmul.f32 1.0, %v1106
  %v1108 = vtanh.pop %v1101
  %v1109 = vmul.f32 %v1107, %v913
  %1111 = vrot.lane.b32.xlu0 %v1108, 64
  %v1112 = vpop.permute.xlu0 %1111
  %v1114 = vmul.f32 %v1107, %v1112
  %1116 = vrot.lane.b32.xlu0 %v1114, 32
  %v1117 = vpop.permute.xlu0 %1116
  %v1119 = vadd.f32 %v1109, %v1117
  %v1120 = vtanh.pop %v1119
  %1122 = vrot.lane.b32.xlu0 %v1120, 64
  %v1123 = vpop.permute.xlu0 %1122
  %v1125 = vmul.f32 %v1107, %v1123
  %1127 = vrot.lane.b32.xlu0 %v1125, 32
  %v1128 = vpop.permute.xlu0 %1127
  %v1129 = vsel %vm203, %v1128, 0
  %1131 = vmatprep.subr.mxu0 %v185
  %1132 = vmatpush1.msra.mxu0 %v184
  %1133 = vmatprep.subr.mxu0 %v187
  %1134 = vmatpush1.msra.mxu0 %v186
  %1135 = vmatprep.subr.mxu0 %v189
  %1136 = vmatpush1.msra.mxu0 %v188
  %1137 = vmatprep.subr.mxu0 %v191
  %1138 = vmatpush1.msra.mxu0 %v190
  %1139 = vmatprep.subr.mxu0 0.0
  %1140 = vmatpush1.msra.mxu0 0.0
  %1141 = vmatprep.subr.mxu0 0.0
  %1142 = vmatpush1.msra.mxu0 0.0
  %1143 = vmatprep.subr.mxu0 0.0
  %1144 = vmatpush1.msra.mxu0 0.0
  %1145 = vmatprep.subr.mxu0 0.0
  %1146 = vmatpush1.msra.mxu0 0.0
  %1147 = vmatprep.subr.mxu0 0.0
  %1148 = vmatpush1.msra.mxu0 0.0
  %1149 = vmatprep.subr.mxu0 0.0
  %1150 = vmatpush1.msra.mxu0 0.0
  %1151 = vmatprep.subr.mxu0 0.0
  %1152 = vmatpush1.msra.mxu0 0.0
  %1153 = vmatprep.subr.mxu0 0.0
  %1154 = vmatpush1.msra.mxu0 0.0
  %1155 = vmatprep.subr.mxu0 0.0
  %1156 = vmatpush1.msra.mxu0 0.0
  %1157 = vmatprep.subr.mxu0 0.0
  %1158 = vmatpush1.msra.mxu0 0.0
  %1159 = vmatprep.subr.mxu0 0.0
  %1160 = vmatpush1.msra.mxu0 0.0
  %1161 = vmatprep.subr.mxu0 0.0
  %1162 = vmatpush1.msra.mxu0 0.0
  %1163 = vmatprep.subr.mxu0 0.0
  %1164 = vmatpush1.msra.mxu0 0.0
  %1165 = vmatprep.subr.mxu0 0.0
  %1166 = vmatpush1.msra.mxu0 0.0
  %1167 = vmatprep.subr.mxu0 0.0
  %1168 = vmatpush1.msra.mxu0 0.0
  %1169 = vmatprep.subr.mxu0 0.0
  %1170 = vmatpush1.msra.mxu0 0.0
  %1171 = vmatprep.subr.mxu0 0.0
  %1172 = vmatpush1.msra.mxu0 0.0
  %1173 = vmatprep.subr.mxu0 0.0
  %1174 = vmatpush1.msra.mxu0 0.0
  %1175 = vmatprep.subr.mxu0 0.0
  %1176 = vmatpush1.msra.mxu0 0.0
  %1177 = vmatprep.subr.mxu0 0.0
  %1178 = vmatpush1.msra.mxu0 0.0
  %1179 = vmatprep.subr.mxu0 0.0
  %1180 = vmatpush1.msra.mxu0 0.0
  %1181 = vmatprep.subr.mxu0 0.0
  %1182 = vmatpush1.msra.mxu0 0.0
  %1183 = vmatprep.subr.mxu0 0.0
  %1184 = vmatpush1.msra.mxu0 0.0
  %1185 = vmatprep.subr.mxu0 0.0
  %1186 = vmatpush1.msra.mxu0 0.0
  %1187 = vmatprep.subr.mxu0 0.0
  %1188 = vmatpush1.msra.mxu0 0.0
  %1189 = vmatprep.subr.mxu0 0.0
  %1190 = vmatpush1.msra.mxu0 0.0
  %1191 = vmatprep.subr.mxu0 0.0
  %1192 = vmatpush1.msra.mxu0 0.0
  %1193 = vmatprep.subr.mxu0 0.0
  %1194 = vmatpush1.msra.mxu0 0.0
  %1195 = vmatprep.mubr.f32.mxu0 0.0
  %1196 = vmatmul.mubr.f32.gmra.mrb[0].mxu0 %v1129
  %v1197 = vpop.f32.mrb[0].mxu0
  %v1198 = vadd.f32 0.0, %v1197
  %v1199 = vpop.f32.mrb[0].mxu0
  %v1200 = vadd.f32 0.0, %v1199
  %1201 = vdwg.mxu0
  %v1202 = vadd.f32 %v1200, %v1096
  %v1203 = vxor.u32 %v1202, 2147483648
  %v1204 = vmul.f32 %v1203, 1.442695
  %v1205 = vpow.pop %v1204
  %v1206 = vadd.f32 %v1205, 1.0
  %v1207 = vrcp.pop %v1206
  %v1208 = vmul.f32 1.0, %v1207
  %v1209 = vtanh.pop %v1202
  %v1210 = vmul.f32 %v1208, %v1014
  %1212 = vrot.lane.b32.xlu0 %v1209, 64
  %v1213 = vpop.permute.xlu0 %1212
  %v1215 = vmul.f32 %v1208, %v1213
  %1217 = vrot.lane.b32.xlu0 %v1215, 32
  %v1218 = vpop.permute.xlu0 %1217
  %v1220 = vadd.f32 %v1210, %v1218
  %v1221 = vtanh.pop %v1220
  %1223 = vrot.lane.b32.xlu0 %v1221, 64
  %v1224 = vpop.permute.xlu0 %1223
  %v1226 = vmul.f32 %v1208, %v1224
  %1228 = vrot.lane.b32.xlu0 %v1226, 32
  %v1229 = vpop.permute.xlu0 %1228
  %s1231 = scalar_lea.vmem [#allocation3], 32
  %1232 = vst.msk [vmem:[%s1231] sm:$0xff] %vm203, %v1229
  %v1233 = vsel %vm203, %v1229, 0
  %1235 = vmatprep.subr.mxu0 0.0
  %1236 = vmatpush1.msra.mxu0 %v192
  %1237 = vmatprep.subr.mxu0 0.0
  %1238 = vmatpush1.msra.mxu0 %v193
  %1239 = vmatprep.subr.mxu0 0.0
  %1240 = vmatpush1.msra.mxu0 %v194
  %1241 = vmatprep.subr.mxu0 0.0
  %1242 = vmatpush1.msra.mxu0 %v195
  %1243 = vmatprep.subr.mxu0 0.0
  %1244 = vmatpush1.msra.mxu0 0.0
  %1245 = vmatprep.subr.mxu0 0.0
  %1246 = vmatpush1.msra.mxu0 0.0
  %1247 = vmatprep.subr.mxu0 0.0
  %1248 = vmatpush1.msra.mxu0 0.0
  %1249 = vmatprep.subr.mxu0 0.0
  %1250 = vmatpush1.msra.mxu0 0.0
  %1251 = vmatprep.subr.mxu0 0.0
  %1252 = vmatpush1.msra.mxu0 0.0
  %1253 = vmatprep.subr.mxu0 0.0
  %1254 = vmatpush1.msra.mxu0 0.0
  %1255 = vmatprep.subr.mxu0 0.0
  %1256 = vmatpush1.msra.mxu0 0.0
  %1257 = vmatprep.subr.mxu0 0.0
  %1258 = vmatpush1.msra.mxu0 0.0
  %1259 = vmatprep.subr.mxu0 0.0
  %1260 = vmatpush1.msra.mxu0 0.0
  %1261 = vmatprep.subr.mxu0 0.0
  %1262 = vmatpush1.msra.mxu0 0.0
  %1263 = vmatprep.subr.mxu0 0.0
  %1264 = vmatpush1.msra.mxu0 0.0
  %1265 = vmatprep.subr.mxu0 0.0
  %1266 = vmatpush1.msra.mxu0 0.0
  %1267 = vmatprep.subr.mxu0 0.0
  %1268 = vmatpush1.msra.mxu0 0.0
  %1269 = vmatprep.subr.mxu0 0.0
  %1270 = vmatpush1.msra.mxu0 0.0
  %1271 = vmatprep.subr.mxu0 0.0
  %1272 = vmatpush1.msra.mxu0 0.0
  %1273 = vmatprep.subr.mxu0 0.0
  %1274 = vmatpush1.msra.mxu0 0.0
  %1275 = vmatprep.subr.mxu0 0.0
  %1276 = vmatpush1.msra.mxu0 0.0
  %1277 = vmatprep.subr.mxu0 0.0
  %1278 = vmatpush1.msra.mxu0 0.0
  %1279 = vmatprep.subr.mxu0 0.0
  %1280 = vmatpush1.msra.mxu0 0.0
  %1281 = vmatprep.subr.mxu0 0.0
  %1282 = vmatpush1.msra.mxu0 0.0
  %1283 = vmatprep.subr.mxu0 0.0
  %1284 = vmatpush1.msra.mxu0 0.0
  %1285 = vmatprep.subr.mxu0 0.0
  %1286 = vmatpush1.msra.mxu0 0.0
  %1287 = vmatprep.subr.mxu0 0.0
  %1288 = vmatpush1.msra.mxu0 0.0
  %1289 = vmatprep.subr.mxu0 0.0
  %1290 = vmatpush1.msra.mxu0 0.0
  %1291 = vmatprep.subr.mxu0 0.0
  %1292 = vmatpush1.msra.mxu0 0.0
  %1293 = vmatprep.subr.mxu0 0.0
  %1294 = vmatpush1.msra.mxu0 0.0
  %1295 = vmatprep.subr.mxu0 0.0
  %1296 = vmatpush1.msra.mxu0 0.0
  %1297 = vmatprep.subr.mxu0 0.0
  %1298 = vmatpush1.msra.mxu0 0.0
  %1299 = vmatprep.mubr.f32.mxu0 0.0
  %1300 = vmatmul.mubr.f32.gmra.mrb[0].mxu0 %v1233
  %v1301 = vpop.f32.mrb[0].mxu0
  %v1302 = vadd.f32 %v201, %v1301
  %v1303 = vpop.f32.mrb[0].mxu0
  %1304 = vdwg.mxu0
  %s1305 = scalar_lea.vmem [#allocation2], 40
  %v1306 = vld [vmem:[%s1305] sm:$0xff]
  %v1307 = vadd.f32 %v1306, %v1198
  %v1308 = vxor.u32 %v1307, 2147483648
  %v1309 = vmul.f32 %v1308, 1.442695
  %v1310 = vpow.pop %v1309
  %v1311 = vadd.f32 %v1310, 1.0
  %v1312 = vrcp.pop %v1311
  %v1313 = vmul.f32 1.0, %v1312
  %v1314 = vtanh.pop %v1307
  %v1315 = vmul.f32 %v1313, %v1119
  %1317 = vrot.lane.b32.xlu0 %v1314, 64
  %v1318 = vpop.permute.xlu0 %1317
  %v1320 = vmul.f32 %v1313, %v1318
  %1322 = vrot.lane.b32.xlu0 %v1320, 32
  %v1323 = vpop.permute.xlu0 %1322
  %v1325 = vadd.f32 %v1315, %v1323
  %v1326 = vtanh.pop %v1325
  %1328 = vrot.lane.b32.xlu0 %v1326, 64
  %v1329 = vpop.permute.xlu0 %1328
  %v1331 = vmul.f32 %v1313, %v1329
  %1333 = vrot.lane.b32.xlu0 %v1331, 32
  %v1334 = vpop.permute.xlu0 %1333
  %v1335 = vsel %vm203, %v1334, 0
  %1337 = vmatprep.subr.mxu0 %v185
  %1338 = vmatpush1.msra.mxu0 %v184
  %1339 = vmatprep.subr.mxu0 %v187
  %1340 = vmatpush1.msra.mxu0 %v186
  %1341 = vmatprep.subr.mxu0 %v189
  %1342 = vmatpush1.msra.mxu0 %v188
  %1343 = vmatprep.subr.mxu0 %v191
  %1344 = vmatpush1.msra.mxu0 %v190
  %1345 = vmatprep.subr.mxu0 0.0
  %1346 = vmatpush1.msra.mxu0 0.0
  %1347 = vmatprep.subr.mxu0 0.0
  %1348 = vmatpush1.msra.mxu0 0.0
  %1349 = vmatprep.subr.mxu0 0.0
  %1350 = vmatpush1.msra.mxu0 0.0
  %1351 = vmatprep.subr.mxu0 0.0
  %1352 = vmatpush1.msra.mxu0 0.0
  %1353 = vmatprep.subr.mxu0 0.0
  %1354 = vmatpush1.msra.mxu0 0.0
  %1355 = vmatprep.subr.mxu0 0.0
  %1356 = vmatpush1.msra.mxu0 0.0
  %1357 = vmatprep.subr.mxu0 0.0
  %1358 = vmatpush1.msra.mxu0 0.0
  %1359 = vmatprep.subr.mxu0 0.0
  %1360 = vmatpush1.msra.mxu0 0.0
  %1361 = vmatprep.subr.mxu0 0.0
  %1362 = vmatpush1.msra.mxu0 0.0
  %1363 = vmatprep.subr.mxu0 0.0
  %1364 = vmatpush1.msra.mxu0 0.0
  %1365 = vmatprep.subr.mxu0 0.0
  %1366 = vmatpush1.msra.mxu0 0.0
  %1367 = vmatprep.subr.mxu0 0.0
  %1368 = vmatpush1.msra.mxu0 0.0
  %1369 = vmatprep.subr.mxu0 0.0
  %1370 = vmatpush1.msra.mxu0 0.0
  %1371 = vmatprep.subr.mxu0 0.0
  %1372 = vmatpush1.msra.mxu0 0.0
  %1373 = vmatprep.subr.mxu0 0.0
  %1374 = vmatpush1.msra.mxu0 0.0
  %1375 = vmatprep.subr.mxu0 0.0
  %1376 = vmatpush1.msra.mxu0 0.0
  %1377 = vmatprep.subr.mxu0 0.0
  %1378 = vmatpush1.msra.mxu0 0.0
  %1379 = vmatprep.subr.mxu0 0.0
  %1380 = vmatpush1.msra.mxu0 0.0
  %1381 = vmatprep.subr.mxu0 0.0
  %1382 = vmatpush1.msra.mxu0 0.0
  %1383 = vmatprep.subr.mxu0 0.0
  %1384 = vmatpush1.msra.mxu0 0.0
  %1385 = vmatprep.subr.mxu0 0.0
  %1386 = vmatpush1.msra.mxu0 0.0
  %1387 = vmatprep.subr.mxu0 0.0
  %1388 = vmatpush1.msra.mxu0 0.0
  %1389 = vmatprep.subr.mxu0 0.0
  %1390 = vmatpush1.msra.mxu0 0.0
  %1391 = vmatprep.subr.mxu0 0.0
  %1392 = vmatpush1.msra.mxu0 0.0
  %1393 = vmatprep.subr.mxu0 0.0
  %1394 = vmatpush1.msra.mxu0 0.0
  %1395 = vmatprep.subr.mxu0 0.0
  %1396 = vmatpush1.msra.mxu0 0.0
  %1397 = vmatprep.subr.mxu0 0.0
  %1398 = vmatpush1.msra.mxu0 0.0
  %1399 = vmatprep.subr.mxu0 0.0
  %1400 = vmatpush1.msra.mxu0 0.0
  %1401 = vmatprep.mubr.f32.mxu0 0.0
  %1402 = vmatmul.mubr.f32.gmra.mrb[0].mxu0 %v1335
  %v1403 = vpop.f32.mrb[0].mxu0
  %v1404 = vadd.f32 0.0, %v1403
  %v1405 = vpop.f32.mrb[0].mxu0
  %v1406 = vadd.f32 0.0, %v1405
  %1407 = vdwg.mxu0
  %v1408 = vadd.f32 %v1406, %v1302
  %v1409 = vxor.u32 %v1408, 2147483648
  %v1410 = vmul.f32 %v1409, 1.442695
  %v1411 = vpow.pop %v1410
  %v1412 = vadd.f32 %v1411, 1.0
  %v1413 = vrcp.pop %v1412
  %v1414 = vmul.f32 1.0, %v1413
  %v1415 = vtanh.pop %v1408
  %v1416 = vmul.f32 %v1414, %v1220
  %1418 = vrot.lane.b32.xlu0 %v1415, 64
  %v1419 = vpop.permute.xlu0 %1418
  %v1421 = vmul.f32 %v1414, %v1419
  %1423 = vrot.lane.b32.xlu0 %v1421, 32
  %v1424 = vpop.permute.xlu0 %1423
  %v1426 = vadd.f32 %v1416, %v1424
  %v1427 = vtanh.pop %v1426
  %1429 = vrot.lane.b32.xlu0 %v1427, 64
  %v1430 = vpop.permute.xlu0 %1429
  %v1432 = vmul.f32 %v1414, %v1430
  %1434 = vrot.lane.b32.xlu0 %v1432, 32
  %v1435 = vpop.permute.xlu0 %1434
  %s1437 = scalar_lea.vmem [#allocation3], 40
  %1438 = vst.msk [vmem:[%s1437] sm:$0xff] %vm203, %v1435
  %v1439 = vsel %vm203, %v1435, 0
  %1441 = vmatprep.subr.mxu0 0.0
  %1442 = vmatpush1.msra.mxu0 %v192
  %1443 = vmatprep.subr.mxu0 0.0
  %1444 = vmatpush1.msra.mxu0 %v193
  %1445 = vmatprep.subr.mxu0 0.0
  %1446 = vmatpush1.msra.mxu0 %v194
  %1447 = vmatprep.subr.mxu0 0.0
  %1448 = vmatpush1.msra.mxu0 %v195
  %1449 = vmatprep.subr.mxu0 0.0
  %1450 = vmatpush1.msra.mxu0 0.0
  %1451 = vmatprep.subr.mxu0 0.0
  %1452 = vmatpush1.msra.mxu0 0.0
  %1453 = vmatprep.subr.mxu0 0.0
  %1454 = vmatpush1.msra.mxu0 0.0
  %1455 = vmatprep.subr.mxu0 0.0
  %1456 = vmatpush1.msra.mxu0 0.0
  %1457 = vmatprep.subr.mxu0 0.0
  %1458 = vmatpush1.msra.mxu0 0.0
  %1459 = vmatprep.subr.mxu0 0.0
  %1460 = vmatpush1.msra.mxu0 0.0
  %1461 = vmatprep.subr.mxu0 0.0
  %1462 = vmatpush1.msra.mxu0 0.0
  %1463 = vmatprep.subr.mxu0 0.0
  %1464 = vmatpush1.msra.mxu0 0.0
  %1465 = vmatprep.subr.mxu0 0.0
  %1466 = vmatpush1.msra.mxu0 0.0
  %1467 = vmatprep.subr.mxu0 0.0
  %1468 = vmatpush1.msra.mxu0 0.0
  %1469 = vmatprep.subr.mxu0 0.0
  %1470 = vmatpush1.msra.mxu0 0.0
  %1471 = vmatprep.subr.mxu0 0.0
  %1472 = vmatpush1.msra.mxu0 0.0
  %1473 = vmatprep.subr.mxu0 0.0
  %1474 = vmatpush1.msra.mxu0 0.0
  %1475 = vmatprep.subr.mxu0 0.0
  %1476 = vmatpush1.msra.mxu0 0.0
  %1477 = vmatprep.subr.mxu0 0.0
  %1478 = vmatpush1.msra.mxu0 0.0
  %1479 = vmatprep.subr.mxu0 0.0
  %1480 = vmatpush1.msra.mxu0 0.0
  %1481 = vmatprep.subr.mxu0 0.0
  %1482 = vmatpush1.msra.mxu0 0.0
  %1483 = vmatprep.subr.mxu0 0.0
  %1484 = vmatpush1.msra.mxu0 0.0
  %1485 = vmatprep.subr.mxu0 0.0
  %1486 = vmatpush1.msra.mxu0 0.0
  %1487 = vmatprep.subr.mxu0 0.0
  %1488 = vmatpush1.msra.mxu0 0.0
  %1489 = vmatprep.subr.mxu0 0.0
  %1490 = vmatpush1.msra.mxu0 0.0
  %1491 = vmatprep.subr.mxu0 0.0
  %1492 = vmatpush1.msra.mxu0 0.0
  %1493 = vmatprep.subr.mxu0 0.0
  %1494 = vmatpush1.msra.mxu0 0.0
  %1495 = vmatprep.subr.mxu0 0.0
  %1496 = vmatpush1.msra.mxu0 0.0
  %1497 = vmatprep.subr.mxu0 0.0
  %1498 = vmatpush1.msra.mxu0 0.0
  %1499 = vmatprep.subr.mxu0 0.0
  %1500 = vmatpush1.msra.mxu0 0.0
  %1501 = vmatprep.subr.mxu0 0.0
  %1502 = vmatpush1.msra.mxu0 0.0
  %1503 = vmatprep.subr.mxu0 0.0
  %1504 = vmatpush1.msra.mxu0 0.0
  %1505 = vmatprep.mubr.f32.mxu0 0.0
  %1506 = vmatmul.mubr.f32.gmra.mrb[0].mxu0 %v1439
  %v1507 = vpop.f32.mrb[0].mxu0
  %v1508 = vadd.f32 %v201, %v1507
  %v1509 = vpop.f32.mrb[0].mxu0
  %1510 = vdwg.mxu0
  %s1511 = scalar_lea.vmem [#allocation2], 48
  %v1512 = vld [vmem:[%s1511] sm:$0xff]
  %v1513 = vadd.f32 %v1512, %v1404
  %v1514 = vxor.u32 %v1513, 2147483648
  %v1515 = vmul.f32 %v1514, 1.442695
  %v1516 = vpow.pop %v1515
  %v1517 = vadd.f32 %v1516, 1.0
  %v1518 = vrcp.pop %v1517
  %v1519 = vmul.f32 1.0, %v1518
  %v1520 = vtanh.pop %v1513
  %v1521 = vmul.f32 %v1519, %v1325
  %1523 = vrot.lane.b32.xlu0 %v1520, 64
  %v1524 = vpop.permute.xlu0 %1523
  %v1526 = vmul.f32 %v1519, %v1524
  %1528 = vrot.lane.b32.xlu0 %v1526, 32
  %v1529 = vpop.permute.xlu0 %1528
  %v1531 = vadd.f32 %v1521, %v1529
  %v1532 = vtanh.pop %v1531
  %1534 = vrot.lane.b32.xlu0 %v1532, 64
  %v1535 = vpop.permute.xlu0 %1534
  %v1537 = vmul.f32 %v1519, %v1535
  %1539 = vrot.lane.b32.xlu0 %v1537, 32
  %v1540 = vpop.permute.xlu0 %1539
  %v1541 = vsel %vm203, %v1540, 0
  %1543 = vmatprep.subr.mxu0 %v185
  %1544 = vmatpush1.msra.mxu0 %v184
  %1545 = vmatprep.subr.mxu0 %v187
  %1546 = vmatpush1.msra.mxu0 %v186
  %1547 = vmatprep.subr.mxu0 %v189
  %1548 = vmatpush1.msra.mxu0 %v188
  %1549 = vmatprep.subr.mxu0 %v191
  %1550 = vmatpush1.msra.mxu0 %v190
  %1551 = vmatprep.subr.mxu0 0.0
  %1552 = vmatpush1.msra.mxu0 0.0
  %1553 = vmatprep.subr.mxu0 0.0
  %1554 = vmatpush1.msra.mxu0 0.0
  %1555 = vmatprep.subr.mxu0 0.0
  %1556 = vmatpush1.msra.mxu0 0.0
  %1557 = vmatprep.subr.mxu0 0.0
  %1558 = vmatpush1.msra.mxu0 0.0
  %1559 = vmatprep.subr.mxu0 0.0
  %1560 = vmatpush1.msra.mxu0 0.0
  %1561 = vmatprep.subr.mxu0 0.0
  %1562 = vmatpush1.msra.mxu0 0.0
  %1563 = vmatprep.subr.mxu0 0.0
  %1564 = vmatpush1.msra.mxu0 0.0
  %1565 = vmatprep.subr.mxu0 0.0
  %1566 = vmatpush1.msra.mxu0 0.0
  %1567 = vmatprep.subr.mxu0 0.0
  %1568 = vmatpush1.msra.mxu0 0.0
  %1569 = vmatprep.subr.mxu0 0.0
  %1570 = vmatpush1.msra.mxu0 0.0
  %1571 = vmatprep.subr.mxu0 0.0
  %1572 = vmatpush1.msra.mxu0 0.0
  %1573 = vmatprep.subr.mxu0 0.0
  %1574 = vmatpush1.msra.mxu0 0.0
  %1575 = vmatprep.subr.mxu0 0.0
  %1576 = vmatpush1.msra.mxu0 0.0
  %1577 = vmatprep.subr.mxu0 0.0
  %1578 = vmatpush1.msra.mxu0 0.0
  %1579 = vmatprep.subr.mxu0 0.0
  %1580 = vmatpush1.msra.mxu0 0.0
  %1581 = vmatprep.subr.mxu0 0.0
  %1582 = vmatpush1.msra.mxu0 0.0
  %1583 = vmatprep.subr.mxu0 0.0
  %1584 = vmatpush1.msra.mxu0 0.0
  %1585 = vmatprep.subr.mxu0 0.0
  %1586 = vmatpush1.msra.mxu0 0.0
  %1587 = vmatprep.subr.mxu0 0.0
  %1588 = vmatpush1.msra.mxu0 0.0
  %1589 = vmatprep.subr.mxu0 0.0
  %1590 = vmatpush1.msra.mxu0 0.0
  %1591 = vmatprep.subr.mxu0 0.0
  %1592 = vmatpush1.msra.mxu0 0.0
  %1593 = vmatprep.subr.mxu0 0.0
  %1594 = vmatpush1.msra.mxu0 0.0
  %1595 = vmatprep.subr.mxu0 0.0
  %1596 = vmatpush1.msra.mxu0 0.0
  %1597 = vmatprep.subr.mxu0 0.0
  %1598 = vmatpush1.msra.mxu0 0.0
  %1599 = vmatprep.subr.mxu0 0.0
  %1600 = vmatpush1.msra.mxu0 0.0
  %1601 = vmatprep.subr.mxu0 0.0
  %1602 = vmatpush1.msra.mxu0 0.0
  %1603 = vmatprep.subr.mxu0 0.0
  %1604 = vmatpush1.msra.mxu0 0.0
  %1605 = vmatprep.subr.mxu0 0.0
  %1606 = vmatpush1.msra.mxu0 0.0
  %1607 = vmatprep.mubr.f32.mxu0 0.0
  %1608 = vmatmul.mubr.f32.gmra.mrb[0].mxu0 %v1541
  %v1609 = vpop.f32.mrb[0].mxu0
  %v1610 = vadd.f32 0.0, %v1609
  %v1611 = vpop.f32.mrb[0].mxu0
  %v1612 = vadd.f32 0.0, %v1611
  %1613 = vdwg.mxu0
  %v1614 = vadd.f32 %v1612, %v1508
  %v1615 = vxor.u32 %v1614, 2147483648
  %v1616 = vmul.f32 %v1615, 1.442695
  %v1617 = vpow.pop %v1616
  %v1618 = vadd.f32 %v1617, 1.0
  %v1619 = vrcp.pop %v1618
  %v1620 = vmul.f32 1.0, %v1619
  %v1621 = vtanh.pop %v1614
  %v1622 = vmul.f32 %v1620, %v1426
  %1624 = vrot.lane.b32.xlu0 %v1621, 64
  %v1625 = vpop.permute.xlu0 %1624
  %v1627 = vmul.f32 %v1620, %v1625
  %1629 = vrot.lane.b32.xlu0 %v1627, 32
  %v1630 = vpop.permute.xlu0 %1629
  %v1632 = vadd.f32 %v1622, %v1630
  %v1633 = vtanh.pop %v1632
  %1635 = vrot.lane.b32.xlu0 %v1633, 64
  %v1636 = vpop.permute.xlu0 %1635
  %v1638 = vmul.f32 %v1620, %v1636
  %1640 = vrot.lane.b32.xlu0 %v1638, 32
  %v1641 = vpop.permute.xlu0 %1640
  %s1643 = scalar_lea.vmem [#allocation3], 48
  %1644 = vst.msk [vmem:[%s1643] sm:$0xff] %vm203, %v1641
  %v1645 = vsel %vm203, %v1641, 0
  %1647 = vmatprep.subr.mxu0 0.0
  %1648 = vmatpush1.msra.mxu0 %v192
  %1649 = vmatprep.subr.mxu0 0.0
  %1650 = vmatpush1.msra.mxu0 %v193
  %1651 = vmatprep.subr.mxu0 0.0
  %1652 = vmatpush1.msra.mxu0 %v194
  %1653 = vmatprep.subr.mxu0 0.0
  %1654 = vmatpush1.msra.mxu0 %v195
  %1655 = vmatprep.subr.mxu0 0.0
  %1656 = vmatpush1.msra.mxu0 0.0
  %1657 = vmatprep.subr.mxu0 0.0
  %1658 = vmatpush1.msra.mxu0 0.0
  %1659 = vmatprep.subr.mxu0 0.0
  %1660 = vmatpush1.msra.mxu0 0.0
  %1661 = vmatprep.subr.mxu0 0.0
  %1662 = vmatpush1.msra.mxu0 0.0
  %1663 = vmatprep.subr.mxu0 0.0
  %1664 = vmatpush1.msra.mxu0 0.0
  %1665 = vmatprep.subr.mxu0 0.0
  %1666 = vmatpush1.msra.mxu0 0.0
  %1667 = vmatprep.subr.mxu0 0.0
  %1668 = vmatpush1.msra.mxu0 0.0
  %1669 = vmatprep.subr.mxu0 0.0
  %1670 = vmatpush1.msra.mxu0 0.0
  %1671 = vmatprep.subr.mxu0 0.0
  %1672 = vmatpush1.msra.mxu0 0.0
  %1673 = vmatprep.subr.mxu0 0.0
  %1674 = vmatpush1.msra.mxu0 0.0
  %1675 = vmatprep.subr.mxu0 0.0
  %1676 = vmatpush1.msra.mxu0 0.0
  %1677 = vmatprep.subr.mxu0 0.0
  %1678 = vmatpush1.msra.mxu0 0.0
  %1679 = vmatprep.subr.mxu0 0.0
  %1680 = vmatpush1.msra.mxu0 0.0
  %1681 = vmatprep.subr.mxu0 0.0
  %1682 = vmatpush1.msra.mxu0 0.0
  %1683 = vmatprep.subr.mxu0 0.0
  %1684 = vmatpush1.msra.mxu0 0.0
  %1685 = vmatprep.subr.mxu0 0.0
  %1686 = vmatpush1.msra.mxu0 0.0
  %1687 = vmatprep.subr.mxu0 0.0
  %1688 = vmatpush1.msra.mxu0 0.0
  %1689 = vmatprep.subr.mxu0 0.0
  %1690 = vmatpush1.msra.mxu0 0.0
  %1691 = vmatprep.subr.mxu0 0.0
  %1692 = vmatpush1.msra.mxu0 0.0
  %1693 = vmatprep.subr.mxu0 0.0
  %1694 = vmatpush1.msra.mxu0 0.0
  %1695 = vmatprep.subr.mxu0 0.0
  %1696 = vmatpush1.msra.mxu0 0.0
  %1697 = vmatprep.subr.mxu0 0.0
  %1698 = vmatpush1.msra.mxu0 0.0
  %1699 = vmatprep.subr.mxu0 0.0
  %1700 = vmatpush1.msra.mxu0 0.0
  %1701 = vmatprep.subr.mxu0 0.0
  %1702 = vmatpush1.msra.mxu0 0.0
  %1703 = vmatprep.subr.mxu0 0.0
  %1704 = vmatpush1.msra.mxu0 0.0
  %1705 = vmatprep.subr.mxu0 0.0
  %1706 = vmatpush1.msra.mxu0 0.0
  %1707 = vmatprep.subr.mxu0 0.0
  %1708 = vmatpush1.msra.mxu0 0.0
  %1709 = vmatprep.subr.mxu0 0.0
  %1710 = vmatpush1.msra.mxu0 0.0
  %1711 = vmatprep.mubr.f32.mxu0 0.0
  %1712 = vmatmul.mubr.f32.gmra.mrb[0].mxu0 %v1645
  %v1713 = vpop.f32.mrb[0].mxu0
  %v1714 = vadd.f32 %v201, %v1713
  %v1715 = vpop.f32.mrb[0].mxu0
  %1716 = vdwg.mxu0
  %s1717 = scalar_lea.vmem [#allocation2], 56
  %v1718 = vld [vmem:[%s1717] sm:$0xff]
  %v1719 = vadd.f32 %v1718, %v1610
  %v1720 = vxor.u32 %v1719, 2147483648
  %v1721 = vmul.f32 %v1720, 1.442695
  %v1722 = vpow.pop %v1721
  %v1723 = vadd.f32 %v1722, 1.0
  %v1724 = vrcp.pop %v1723
  %v1725 = vmul.f32 1.0, %v1724
  %v1726 = vtanh.pop %v1719
  %v1727 = vmul.f32 %v1725, %v1531
  %1729 = vrot.lane.b32.xlu0 %v1726, 64
  %v1730 = vpop.permute.xlu0 %1729
  %v1732 = vmul.f32 %v1725, %v1730
  %1734 = vrot.lane.b32.xlu0 %v1732, 32
  %v1735 = vpop.permute.xlu0 %1734
  %v1737 = vadd.f32 %v1727, %v1735
  %v1738 = vtanh.pop %v1737
  %1740 = vrot.lane.b32.xlu0 %v1738, 64
  %v1741 = vpop.permute.xlu0 %1740
  %v1743 = vmul.f32 %v1725, %v1741
  %1745 = vrot.lane.b32.xlu0 %v1743, 32
  %v1746 = vpop.permute.xlu0 %1745
  %v1747 = vsel %vm203, %v1746, 0
  %1749 = vmatprep.subr.mxu0 %v185
  %1750 = vmatpush1.msra.mxu0 %v184
  %1751 = vmatprep.subr.mxu0 %v187
  %1752 = vmatpush1.msra.mxu0 %v186
  %1753 = vmatprep.subr.mxu0 %v189
  %1754 = vmatpush1.msra.mxu0 %v188
  %1755 = vmatprep.subr.mxu0 %v191
  %1756 = vmatpush1.msra.mxu0 %v190
  %1757 = vmatprep.subr.mxu0 0.0
  %1758 = vmatpush1.msra.mxu0 0.0
  %1759 = vmatprep.subr.mxu0 0.0
  %1760 = vmatpush1.msra.mxu0 0.0
  %1761 = vmatprep.subr.mxu0 0.0
  %1762 = vmatpush1.msra.mxu0 0.0
  %1763 = vmatprep.subr.mxu0 0.0
  %1764 = vmatpush1.msra.mxu0 0.0
  %1765 = vmatprep.subr.mxu0 0.0
  %1766 = vmatpush1.msra.mxu0 0.0
  %1767 = vmatprep.subr.mxu0 0.0
  %1768 = vmatpush1.msra.mxu0 0.0
  %1769 = vmatprep.subr.mxu0 0.0
  %1770 = vmatpush1.msra.mxu0 0.0
  %1771 = vmatprep.subr.mxu0 0.0
  %1772 = vmatpush1.msra.mxu0 0.0
  %1773 = vmatprep.subr.mxu0 0.0
  %1774 = vmatpush1.msra.mxu0 0.0
  %1775 = vmatprep.subr.mxu0 0.0
  %1776 = vmatpush1.msra.mxu0 0.0
  %1777 = vmatprep.subr.mxu0 0.0
  %1778 = vmatpush1.msra.mxu0 0.0
  %1779 = vmatprep.subr.mxu0 0.0
  %1780 = vmatpush1.msra.mxu0 0.0
  %1781 = vmatprep.subr.mxu0 0.0
  %1782 = vmatpush1.msra.mxu0 0.0
  %1783 = vmatprep.subr.mxu0 0.0
  %1784 = vmatpush1.msra.mxu0 0.0
  %1785 = vmatprep.subr.mxu0 0.0
  %1786 = vmatpush1.msra.mxu0 0.0
  %1787 = vmatprep.subr.mxu0 0.0
  %1788 = vmatpush1.msra.mxu0 0.0
  %1789 = vmatprep.subr.mxu0 0.0
  %1790 = vmatpush1.msra.mxu0 0.0
  %1791 = vmatprep.subr.mxu0 0.0
  %1792 = vmatpush1.msra.mxu0 0.0
  %1793 = vmatprep.subr.mxu0 0.0
  %1794 = vmatpush1.msra.mxu0 0.0
  %1795 = vmatprep.subr.mxu0 0.0
  %1796 = vmatpush1.msra.mxu0 0.0
  %1797 = vmatprep.subr.mxu0 0.0
  %1798 = vmatpush1.msra.mxu0 0.0
  %1799 = vmatprep.subr.mxu0 0.0
  %1800 = vmatpush1.msra.mxu0 0.0
  %1801 = vmatprep.subr.mxu0 0.0
  %1802 = vmatpush1.msra.mxu0 0.0
  %1803 = vmatprep.subr.mxu0 0.0
  %1804 = vmatpush1.msra.mxu0 0.0
  %1805 = vmatprep.subr.mxu0 0.0
  %1806 = vmatpush1.msra.mxu0 0.0
  %1807 = vmatprep.subr.mxu0 0.0
  %1808 = vmatpush1.msra.mxu0 0.0
  %1809 = vmatprep.subr.mxu0 0.0
  %1810 = vmatpush1.msra.mxu0 0.0
  %1811 = vmatprep.subr.mxu0 0.0
  %1812 = vmatpush1.msra.mxu0 0.0
  %1813 = vmatprep.mubr.f32.mxu0 0.0
  %1814 = vmatmul.mubr.f32.gmra.mrb[0].mxu0 %v1747
  %v1815 = vpop.f32.mrb[0].mxu0
  %v1816 = vpop.f32.mrb[0].mxu0
  %v1817 = vadd.f32 0.0, %v1816
  %1818 = vdwg.mxu0
  %v1819 = vadd.f32 %v1817, %v1714
  %v1820 = vxor.u32 %v1819, 2147483648
  %v1821 = vmul.f32 %v1820, 1.442695
  %v1822 = vpow.pop %v1821
  %v1823 = vadd.f32 %v1822, 1.0
  %v1824 = vrcp.pop %v1823
  %v1825 = vmul.f32 1.0, %v1824
  %v1826 = vtanh.pop %v1819
  %v1827 = vmul.f32 %v1825, %v1632
  %1829 = vrot.lane.b32.xlu0 %v1826, 64
  %v1830 = vpop.permute.xlu0 %1829
  %v1832 = vmul.f32 %v1825, %v1830
  %1834 = vrot.lane.b32.xlu0 %v1832, 32
  %v1835 = vpop.permute.xlu0 %1834
  %v1837 = vadd.f32 %v1827, %v1835
  %v1838 = vtanh.pop %v1837
  %1840 = vrot.lane.b32.xlu0 %v1838, 64
  %v1841 = vpop.permute.xlu0 %1840
  %v1843 = vmul.f32 %v1825, %v1841
  %1845 = vrot.lane.b32.xlu0 %v1843, 32
  %v1846 = vpop.permute.xlu0 %1845
  %s1848 = scalar_lea.vmem [#allocation3], 56
  %1849 = vst.msk [vmem:[%s1848] sm:$0xff] %vm203, %v1846
  %v1850 = vld [vmem:[#allocation3] sm:$0xff]
  %v1851 = vld [vmem:[#allocation3 + $0x8] sm:$0xff]
  %v1852 = vld [vmem:[#allocation3 + $0x10] sm:$0xff]
  %v1853 = vld [vmem:[#allocation3 + $0x18] sm:$0xff]
  %v1854 = vld [vmem:[#allocation3 + $0x20] sm:$0xff]
  %v1855 = vld [vmem:[#allocation3 + $0x28] sm:$0xff]
  %v1856 = vld [vmem:[#allocation3 + $0x30] sm:$0xff]
  %v1857 = vld [vmem:[#allocation3 + $0x38] sm:$0xff]
  %v1858 = vld [vmem:[%s6] sm:$0xff]
  %v1859 = vld [vmem:[%s6 + $0x8] sm:$0xff]
  %v1860 = vld [vmem:[%s6 + $0x10] sm:$0xff]
  %v1861 = vld [vmem:[%s6 + $0x18] sm:$0xff]
  %v1862 = vld [vmem:[%s7] sm:$0x1]
  %v1864 = vlaneseq
  %v1865 = vshrl.u32 %v1864, 7
  %v1866 = vsub.s32 0, %v1865
  %v1867 = vrot.slane %v1862, %v1866
  %v1870 = vsel %vm203, %v1850, 0
  %v1873 = vsel %vm203, %v1851, 0
  %v1876 = vsel %vm203, %v1852, 0
  %v1879 = vsel %vm203, %v1853, 0
  %v1882 = vsel %vm203, %v1854, 0
  %v1885 = vsel %vm203, %v1855, 0
  %v1888 = vsel %vm203, %v1856, 0
  %v1891 = vsel %vm203, %v1857, 0
  %1893 = vmatprep.subr.mxu0 0.0
  %1894 = vmatpush1.msra.mxu0 %v1858
  %1895 = vmatprep.subr.mxu0 0.0
  %1896 = vmatpush1.msra.mxu0 %v1859
  %1897 = vmatprep.subr.mxu0 0.0
  %1898 = vmatpush1.msra.mxu0 %v1860
  %1899 = vmatprep.subr.mxu0 0.0
  %1900 = vmatpush1.msra.mxu0 %v1861
  %1901 = vmatprep.subr.mxu0 0.0
  %1902 = vmatpush1.msra.mxu0 0.0
  %1903 = vmatprep.subr.mxu0 0.0
  %1904 = vmatpush1.msra.mxu0 0.0
  %1905 = vmatprep.subr.mxu0 0.0
  %1906 = vmatpush1.msra.mxu0 0.0
  %1907 = vmatprep.subr.mxu0 0.0
  %1908 = vmatpush1.msra.mxu0 0.0
  %1909 = vmatprep.subr.mxu0 0.0
  %1910 = vmatpush1.msra.mxu0 0.0
  %1911 = vmatprep.subr.mxu0 0.0
  %1912 = vmatpush1.msra.mxu0 0.0
  %1913 = vmatprep.subr.mxu0 0.0
  %1914 = vmatpush1.msra.mxu0 0.0
  %1915 = vmatprep.subr.mxu0 0.0
  %1916 = vmatpush1.msra.mxu0 0.0
  %1917 = vmatprep.subr.mxu0 0.0
  %1918 = vmatpush1.msra.mxu0 0.0
  %1919 = vmatprep.subr.mxu0 0.0
  %1920 = vmatpush1.msra.mxu0 0.0
  %1921 = vmatprep.subr.mxu0 0.0
  %1922 = vmatpush1.msra.mxu0 0.0
  %1923 = vmatprep.subr.mxu0 0.0
  %1924 = vmatpush1.msra.mxu0 0.0
  %1925 = vmatprep.subr.mxu0 0.0
  %1926 = vmatpush1.msra.mxu0 0.0
  %1927 = vmatprep.subr.mxu0 0.0
  %1928 = vmatpush1.msra.mxu0 0.0
  %1929 = vmatprep.subr.mxu0 0.0
  %1930 = vmatpush1.msra.mxu0 0.0
  %1931 = vmatprep.subr.mxu0 0.0
  %1932 = vmatpush1.msra.mxu0 0.0
  %1933 = vmatprep.subr.mxu0 0.0
  %1934 = vmatpush1.msra.mxu0 0.0
  %1935 = vmatprep.subr.mxu0 0.0
  %1936 = vmatpush1.msra.mxu0 0.0
  %1937 = vmatprep.subr.mxu0 0.0
  %1938 = vmatpush1.msra.mxu0 0.0
  %1939 = vmatprep.subr.mxu0 0.0
  %1940 = vmatpush1.msra.mxu0 0.0
  %1941 = vmatprep.subr.mxu0 0.0
  %1942 = vmatpush1.msra.mxu0 0.0
  %1943 = vmatprep.subr.mxu0 0.0
  %1944 = vmatpush1.msra.mxu0 0.0
  %1945 = vmatprep.subr.mxu0 0.0
  %1946 = vmatpush1.msra.mxu0 0.0
  %1947 = vmatprep.subr.mxu0 0.0
  %1948 = vmatpush1.msra.mxu0 0.0
  %1949 = vmatprep.subr.mxu0 0.0
  %1950 = vmatpush1.msra.mxu0 0.0
  %1951 = vmatprep.subr.mxu0 0.0
  %1952 = vmatpush1.msra.mxu0 0.0
  %1953 = vmatprep.subr.mxu0 0.0
  %1954 = vmatpush1.msra.mxu0 0.0
  %1955 = vmatprep.subr.mxu0 0.0
  %1956 = vmatpush1.msra.mxu0 0.0
  %1957 = vmatprep.mubr.f32.mxu0 0.0
  %1958 = vmatmul.mubr.f32.gmra.mrb[0].mxu0 %v1870
  %v1959 = vpop.f32.mrb[0].mxu0
  %v1960 = vadd.f32 %v1867, %v1959
  %v1961 = vpop.f32.mrb[0].mxu0
  %1962 = vmatprep.mubr.f32.mxu0 0.0
  %1963 = vmatmul.mubr.f32.gmra.mrb[0].mxu0 %v1873
  %v1964 = vpop.f32.mrb[0].mxu0
  %v1965 = vadd.f32 %v1867, %v1964
  %v1966 = vpop.f32.mrb[0].mxu0
  %1967 = vmatprep.mubr.f32.mxu0 0.0
  %1968 = vmatmul.mubr.f32.gmra.mrb[0].mxu0 %v1876
  %v1969 = vpop.f32.mrb[0].mxu0
  %v1970 = vadd.f32 %v1867, %v1969
  %v1971 = vpop.f32.mrb[0].mxu0
  %1972 = vmatprep.mubr.f32.mxu0 0.0
  %1973 = vmatmul.mubr.f32.gmra.mrb[0].mxu0 %v1879
  %v1974 = vpop.f32.mrb[0].mxu0
  %v1975 = vadd.f32 %v1867, %v1974
  %v1976 = vpop.f32.mrb[0].mxu0
  %1977 = vmatprep.mubr.f32.mxu0 0.0
  %1978 = vmatmul.mubr.f32.gmra.mrb[0].mxu0 %v1882
  %v1979 = vpop.f32.mrb[0].mxu0
  %v1980 = vadd.f32 %v1867, %v1979
  %v1981 = vpop.f32.mrb[0].mxu0
  %1982 = vmatprep.mubr.f32.mxu0 0.0
  %1983 = vmatmul.mubr.f32.gmra.mrb[0].mxu0 %v1885
  %v1984 = vpop.f32.mrb[0].mxu0
  %v1985 = vadd.f32 %v1867, %v1984
  %v1986 = vpop.f32.mrb[0].mxu0
  %1987 = vmatprep.mubr.f32.mxu0 0.0
  %1988 = vmatmul.mubr.f32.gmra.mrb[0].mxu0 %v1888
  %v1989 = vpop.f32.mrb[0].mxu0
  %v1990 = vadd.f32 %v1867, %v1989
  %v1991 = vpop.f32.mrb[0].mxu0
  %1992 = vmatprep.mubr.f32.mxu0 0.0
  %1993 = vmatmul.mubr.f32.gmra.mrb[0].mxu0 %v1891
  %v1994 = vpop.f32.mrb[0].mxu0
  %v1995 = vadd.f32 %v1867, %v1994
  %v1996 = vpop.f32.mrb[0].mxu0
  %1997 = vdwg.mxu0
  %vm1998 = vcmask 64512
  %1999 = vst.msk [vmem:[%s8] sm:$0xff] %vm1998, %v1960
  %2000 = vst.msk [vmem:[%s8 + $0x8] sm:$0xff] %vm1998, %v1965
  %2001 = vst.msk [vmem:[%s8 + $0x10] sm:$0xff] %vm1998, %v1970
  %2002 = vst.msk [vmem:[%s8 + $0x18] sm:$0xff] %vm1998, %v1975
  %2003 = vst.msk [vmem:[%s8 + $0x20] sm:$0xff] %vm1998, %v1980
  %2004 = vst.msk [vmem:[%s8 + $0x28] sm:$0xff] %vm1998, %v1985
  %2005 = vst.msk [vmem:[%s8 + $0x30] sm:$0xff] %vm1998, %v1990
  %2006 = vst.msk [vmem:[%s8 + $0x38] sm:$0xff] %vm1998, %v1995
  // Predicated region
  $region34: #{tpu_custom_call.1} parent=0 // pred_check
    _
  $region35: #{tpu_custom_call.1} parent=0 // pred_check_branch
    %2008 = sbr.rel (0) target = $region37
  $region36: #{tpu_custom_call.1} parent=0 // pred_region
    _
  $region37: #{tpu_custom_call.1} parent=0 // pred_fallthru
    _
  // Predicated region
  $region38: #{tpu_custom_call.1} parent=0 // pred_check
    _
  $region39: #{tpu_custom_call.1} parent=0 // pred_check_branch
    %2010 = sbr.rel (0) target = $region41
  $region40: #{tpu_custom_call.1} parent=0 // pred_region
    _
  $region41: #{tpu_custom_call.1} parent=0 // pred_fallthru
    _

</llo_original>
